<compile_context>
chip_gen: v7x
topology: tpu7x:2x2x1
jax: 0.10.0
libtpu: 0.0.40
codegen_flags: <defaults>
</compile_context>

<pallas_src>
import math

import jax
import jax.numpy as jnp
from jax.experimental import pallas as pl
from jax.experimental.pallas import tpu as pltpu

# ---------------- small synthetic "bert-base" config ----------------
VOCAB = 100
TYPE_VOCAB = 2
MAX_POS = 64
HIDDEN = 32
N_LAYERS = 2
N_HEADS = 2
HEAD_DIM = HIDDEN // N_HEADS
INTERMEDIATE = 64
LN_EPS = 1e-12

MXU_DTYPE = jnp.bfloat16  # MXU operand dtype; accumulation stays f32.


def _full_spec(shape):
    # Whole-array block (everything here is tiny, so one VMEM-resident tile).
    return pl.BlockSpec(shape, lambda: (0,) * len(shape))


# ---------------- in-kernel helpers ----------------

def _layer_norm(x, g, b):
    mean = jnp.mean(x, axis=-1, keepdims=True)
    diff = x - mean
    var = jnp.mean(diff * diff, axis=-1, keepdims=True)
    return diff * jax.lax.rsqrt(var + LN_EPS) * g + b


def _gelu_tanh(y):
    # TODO(synk): HF BERT uses exact erf-GELU; tanh approximation used here.
    c = jnp.float32(math.sqrt(2.0 / math.pi))
    return 0.5 * y * (1.0 + jnp.tanh(c * (y + 0.044715 * y * y * y)))


def _mxu_dot(a, w):
    # bf16 operands on the MXU, f32 accumulation.
    return jnp.dot(a.astype(MXU_DTYPE), w.astype(MXU_DTYPE),
                   preferred_element_type=jnp.float32)


def _mxu_einsum(eq, a, b):
    return jnp.einsum(eq, a.astype(MXU_DTYPE), b.astype(MXU_DTYPE),
                      preferred_element_type=jnp.float32)


# ---------------- the fused BERT forward kernel ----------------

def _bert_fused_kernel(ids_ref, typ_ref, mask_ref,
                       word_ref, pos_ref, type_ref,
                       emb_g_ref, emb_b_ref,
                       wqkv_ref, bqkv_ref, wo_ref, bo_ref,
                       ln1_g_ref, ln1_b_ref,
                       wi_ref, bi_ref, wo2_ref, bo2_ref,
                       ln2_g_ref, ln2_b_ref,
                       pw_ref, pb_ref,
                       hidden_ref, pooled_ref):
    B, S = mask_ref.shape
    BS = B * S
    vocab = word_ref.shape[0]
    tvocab = type_ref.shape[0]
    n_layers = wqkv_ref.shape[0]
    scale = jnp.float32(1.0 / math.sqrt(HEAD_DIM))

    # ---- embeddings: one-hot MXU gathers on VMEM-resident tables ----
    # TODO(synk): at real vocab size (30522 x 768) the table does not fit
    # VMEM; keep the word-embedding gather in XLA (or per-row Element
    # index_map) at that scale.
    ids = ids_ref[...]                                           # (BS, 1) i32
    typ = typ_ref[...]                                           # (BS, 1) i32
    word_oh = (jax.lax.broadcasted_iota(jnp.int32, (BS, vocab), 1)
               == ids).astype(jnp.float32)
    type_oh = (jax.lax.broadcasted_iota(jnp.int32, (BS, tvocab), 1)
               == typ).astype(jnp.float32)
    word_vec = jnp.dot(word_oh, word_ref[...],
                       preferred_element_type=jnp.float32)       # (BS, H)
    type_vec = jnp.dot(type_oh, type_ref[...],
                       preferred_element_type=jnp.float32)       # (BS, H)
    pos_vec = jnp.concatenate([pos_ref[0:S, :]] * B, axis=0)     # (BS, H)

    x = _layer_norm(word_vec + pos_vec + type_vec,
                    emb_g_ref[...], emb_b_ref[...])

    # ---- additive attention mask, built once on the VPU (in-kernel) ----
    mask_add = (1.0 - mask_ref[...].astype(jnp.float32)) * jnp.float32(-1e9)
    mask3 = jnp.stack(
        [mask_add[b:b + 1, :] for b in range(B) for _ in range(N_HEADS)],
        axis=0)                                                  # (B*NH, 1, S)

    # ---- encoder layers (unrolled; N_LAYERS is tiny here) ----
    # TODO(synk): for real depth (12 layers) stream per-layer bf16 weights via
    # a grid axis ("arbitrary", index_map l -> (l, 0, 0)) with x carried in a
    # VMEM scratch, mark the B*S row axis "parallel" (v7x has 2 TCs), and size
    # tiles / vmem_limit_bytes against v7x's 64 MiB VMEM.
    for l in range(n_layers):
        # Fused QKV projection: one (BS, H) x (H, 3H) MXU pass.
        qkv = _mxu_dot(x, wqkv_ref[l]) + bqkv_ref[l]             # (BS, 3H) f32

        # Head split stays in vregs: static lane/sublane slices stacked into a
        # (B*NH, S, HD) batch, then ONE batched einsum pair per layer.
        q_l, k_l, v_l = [], [], []
        for b in range(B):
            rows = slice(b * S, (b + 1) * S)
            for h in range(N_HEADS):
                c0 = h * HEAD_DIM
                q_l.append(qkv[rows, c0:c0 + HEAD_DIM])
                k_l.append(qkv[rows, HIDDEN + c0:HIDDEN + c0 + HEAD_DIM])
                v_l.append(qkv[rows, 2 * HIDDEN + c0:2 * HIDDEN + c0 + HEAD_DIM])
        q3 = jnp.stack(q_l, axis=0)                              # (B*NH, S, HD)
        k3 = jnp.stack(k_l, axis=0)
        v3 = jnp.stack(v_l, axis=0)

        s3 = _mxu_einsum('bqd,bkd->bqk', q3, k3) * scale + mask3  # (B*NH, S, S)
        mx = jnp.max(s3, axis=-1, keepdims=True)
        p = jnp.exp(s3 - mx)
        denom = jnp.sum(p, axis=-1, keepdims=True)
        p = p * pl.reciprocal(denom, approx=True)                # EUP slot
        ctx3 = _mxu_einsum('bqk,bkd->bqd', p, v3)                # (B*NH, S, HD)

        # Head merge in vregs: one lane-concat per batch + one sublane concat
        # (no masked 16-lane column stores, no scratch readback).
        ctx = jnp.concatenate(
            [jnp.concatenate([ctx3[b * N_HEADS + h] for h in range(N_HEADS)],
                             axis=-1)
             for b in range(B)],
            axis=0)                                              # (BS, H)

        # Attention output projection + residual + LN1.
        attn_out = _mxu_dot(ctx, wo_ref[l]) + bo_ref[l]
        x = _layer_norm(attn_out + x, ln1_g_ref[l], ln1_b_ref[l])

        # FFN (GELU) + residual + LN2 (elementwise kept in f32).
        inter = _gelu_tanh(_mxu_dot(x, wi_ref[l]) + bi_ref[l])
        ffn_out = _mxu_dot(inter, wo2_ref[l]) + bo2_ref[l]
        x = _layer_norm(ffn_out + x, ln2_g_ref[l], ln2_b_ref[l])

    # NOTE: the two remaining HBM writes are tiny (2 KiB + 256 B); at real
    # hidden sizes (H=768, multiple of 128) the stores are already lane-dense
    # unmasked vst -- nothing further to do here.
    hidden_ref[...] = x

    # Pooler epilogue: CLS rows via one strided sublane read of the output.
    cls = hidden_ref[pl.ds(0, B, stride=S), :]                   # rows 0, S, ...
    pooled_ref[...] = jnp.tanh(_mxu_dot(cls, pw_ref[...]) + pb_ref[...])


# ---------------- parameter init (deterministic, synthetic) ----------------

def init_params(key):
    def nrm(k, shape, dtype=jnp.float32):
        return (0.02 * jax.random.normal(k, shape, dtype=jnp.float32)).astype(dtype)

    keys = jax.random.split(key, 8)
    bf = MXU_DTYPE
    return {
        # Embedding tables stay f32 (gather exactness); matmul weights bf16.
        "word_emb": nrm(keys[0], (VOCAB, HIDDEN)),
        "pos_emb": nrm(keys[1], (MAX_POS, HIDDEN)),
        "type_emb": nrm(keys[2], (TYPE_VOCAB, HIDDEN)),
        "emb_ln_g": jnp.ones((1, HIDDEN), jnp.float32),
        "emb_ln_b": jnp.zeros((1, HIDDEN), jnp.float32),
        # Per-layer weights stacked on a leading N_LAYERS axis; Q/K/V fused.
        "wqkv": nrm(keys[3], (N_LAYERS, HIDDEN, 3 * HIDDEN), bf),
        "bqkv": jnp.zeros((N_LAYERS, 1, 3 * HIDDEN), jnp.float32),
        "wo": nrm(keys[4], (N_LAYERS, HIDDEN, HIDDEN), bf),
        "bo": jnp.zeros((N_LAYERS, 1, HIDDEN), jnp.float32),
        "ln1_g": jnp.ones((N_LAYERS, 1, HIDDEN), jnp.float32),
        "ln1_b": jnp.zeros((N_LAYERS, 1, HIDDEN), jnp.float32),
        "wi": nrm(keys[5], (N_LAYERS, HIDDEN, INTERMEDIATE), bf),
        "bi": jnp.zeros((N_LAYERS, 1, INTERMEDIATE), jnp.float32),
        "wo2": nrm(keys[6], (N_LAYERS, INTERMEDIATE, HIDDEN), bf),
        "bo2": jnp.zeros((N_LAYERS, 1, HIDDEN), jnp.float32),
        "ln2_g": jnp.ones((N_LAYERS, 1, HIDDEN), jnp.float32),
        "ln2_b": jnp.zeros((N_LAYERS, 1, HIDDEN), jnp.float32),
        "pooler_w": nrm(keys[7], (HIDDEN, HIDDEN), bf),
        "pooler_b": jnp.zeros((1, HIDDEN), jnp.float32),
    }


# ---------------- BertEmbedding.forward equivalent ----------------

def bert_forward(params, input_ids, attention_mask, token_type_ids):
    B, S = input_ids.shape

    # Only trivial layout prep stays in XLA; everything else (gathers, mask,
    # all layers, pooler) is inside the single fused Pallas call.
    ids = input_ids.reshape(B * S, 1).astype(jnp.int32)
    typ = token_type_ids.reshape(B * S, 1).astype(jnp.int32)
    mask = attention_mask.astype(jnp.int32)

    inputs = (ids, typ, mask,
              params["word_emb"], params["pos_emb"], params["type_emb"],
              params["emb_ln_g"], params["emb_ln_b"],
              params["wqkv"], params["bqkv"], params["wo"], params["bo"],
              params["ln1_g"], params["ln1_b"], params["wi"], params["bi"],
              params["wo2"], params["bo2"], params["ln2_g"], params["ln2_b"],
              params["pooler_w"], params["pooler_b"])

    hidden, pooled = pl.pallas_call(
        _bert_fused_kernel,
        out_shape=(jax.ShapeDtypeStruct((B * S, HIDDEN), jnp.float32),
                   jax.ShapeDtypeStruct((B, HIDDEN), jnp.float32)),
        in_specs=[_full_spec(a.shape) for a in inputs],
        out_specs=(_full_spec((B * S, HIDDEN)), _full_spec((B, HIDDEN))),
        compiler_params=pltpu.CompilerParams(vmem_limit_bytes=16 * 1024 * 1024),
    )(*inputs)

    return hidden.reshape(B, S, HIDDEN), pooled


class BertEmbedding:
    """JAX/Pallas analogue of the PyTorch BertEmbedding module (BertModel fwd)."""

    def __init__(self, key):
        self.params = init_params(key)
        self._fwd = jax.jit(bert_forward)

    def __call__(self, input_ids, attention_mask, token_type_ids):
        return self._fwd(self.params, input_ids, attention_mask, token_type_ids)


if __name__ == "__main__":
    key = jax.random.PRNGKey(0)
    k_param, k_ids, k_types = jax.random.split(key, 3)

    B, S = 2, 8
    input_ids = jax.random.randint(k_ids, (B, S), 0, VOCAB, dtype=jnp.int32)
    attention_mask = jnp.ones((B, S), dtype=jnp.int32).at[1, 6:].set(0)
    token_type_ids = jax.random.randint(k_types, (B, S), 0, TYPE_VOCAB,
                                        dtype=jnp.int32)

    model = BertEmbedding(k_param)
    last_hidden, pooled = model(input_ids, attention_mask, token_type_ids)
    jax.block_until_ready((last_hidden, pooled))

    assert last_hidden.shape == (B, S, HIDDEN)
    assert pooled.shape == (B, HIDDEN)
    assert bool(jnp.isfinite(last_hidden).all())
    assert bool(jnp.isfinite(pooled).all())
    print("KERNEL_OK")
</pallas_src>

<mosaic_0001>
module attributes {stable_mosaic.version = 11 : i64} {
  func.func @_bert_fused_kernel(%arg0: memref<16x1xi32, #tpu.memory_space<vmem>>, %arg1: memref<16x1xi32, #tpu.memory_space<vmem>>, %arg2: memref<2x8xi32, #tpu.memory_space<vmem>>, %arg3: memref<100x32xf32, #tpu.memory_space<vmem>>, %arg4: memref<64x32xf32, #tpu.memory_space<vmem>>, %arg5: memref<2x32xf32, #tpu.memory_space<vmem>>, %arg6: memref<1x32xf32, #tpu.memory_space<vmem>>, %arg7: memref<1x32xf32, #tpu.memory_space<vmem>>, %arg8: memref<2x32x96xbf16, #tpu.memory_space<vmem>>, %arg9: memref<2x1x96xf32, #tpu.memory_space<vmem>>, %arg10: memref<2x32x32xbf16, #tpu.memory_space<vmem>>, %arg11: memref<2x1x32xf32, #tpu.memory_space<vmem>>, %arg12: memref<2x1x32xf32, #tpu.memory_space<vmem>>, %arg13: memref<2x1x32xf32, #tpu.memory_space<vmem>>, %arg14: memref<2x32x64xbf16, #tpu.memory_space<vmem>>, %arg15: memref<2x1x64xf32, #tpu.memory_space<vmem>>, %arg16: memref<2x64x32xbf16, #tpu.memory_space<vmem>>, %arg17: memref<2x1x32xf32, #tpu.memory_space<vmem>>, %arg18: memref<2x1x32xf32, #tpu.memory_space<vmem>>, %arg19: memref<2x1x32xf32, #tpu.memory_space<vmem>>, %arg20: memref<32x32xbf16, #tpu.memory_space<vmem>>, %arg21: memref<1x32xf32, #tpu.memory_space<vmem>>, %arg22: memref<16x32xf32, #tpu.memory_space<vmem>>, %arg23: memref<2x32xf32, #tpu.memory_space<vmem>>) attributes {dimension_semantics = [], scalar_prefetch = 0 : i64, scratch_operands = 0 : i64, tpu.core_type = #tpu.core_type<tc>} {
    %c0 = arith.constant 0 : index
    %c0_0 = arith.constant 0 : index
    %0 = vector.load %arg0[%c0, %c0_0] : memref<16x1xi32, #tpu.memory_space<vmem>>, vector<16x1xi32>
    %c0_1 = arith.constant 0 : index
    %c0_2 = arith.constant 0 : index
    %1 = vector.load %arg1[%c0_1, %c0_2] : memref<16x1xi32, #tpu.memory_space<vmem>>, vector<16x1xi32>
    %2 = tpu.iota {dimensions = array<i32: 1>} : vector<16x100xi32>
    %3 = vector.broadcast %0 : vector<16x1xi32> to vector<16x100xi32>
    %4 = arith.cmpi eq, %2, %3 : vector<16x100xi32>
    %5 = arith.extui %4 : vector<16x100xi1> to vector<16x100xi32>
    %6 = arith.sitofp %5 : vector<16x100xi32> to vector<16x100xf32>
    %7 = tpu.iota {dimensions = array<i32: 1>} : vector<16x2xi32>
    %8 = vector.broadcast %1 : vector<16x1xi32> to vector<16x2xi32>
    %9 = arith.cmpi eq, %7, %8 : vector<16x2xi32>
    %10 = arith.extui %9 : vector<16x2xi1> to vector<16x2xi32>
    %11 = arith.sitofp %10 : vector<16x2xi32> to vector<16x2xf32>
    %c0_3 = arith.constant 0 : index
    %c0_4 = arith.constant 0 : index
    %12 = vector.load %arg3[%c0_3, %c0_4] : memref<100x32xf32, #tpu.memory_space<vmem>>, vector<100x32xf32>
    %cst = arith.constant dense<0.000000e+00> : vector<16x32xf32>
    %13 = tpu.matmul %6, %12, %cst {dimension_numbers = #tpu.dot_dimension_numbers<[1], [0], [0], [1], [0, 0, 1, 1], [], []>} : vector<16x100xf32>, vector<100x32xf32>, vector<16x32xf32> -> vector<16x32xf32>
    %c0_5 = arith.constant 0 : index
    %c0_6 = arith.constant 0 : index
    %14 = vector.load %arg5[%c0_5, %c0_6] : memref<2x32xf32, #tpu.memory_space<vmem>>, vector<2x32xf32>
    %cst_7 = arith.constant dense<0.000000e+00> : vector<16x32xf32>
    %15 = tpu.matmul %11, %14, %cst_7 {dimension_numbers = #tpu.dot_dimension_numbers<[1], [0], [0], [1], [0, 0, 1, 1], [], []>} : vector<16x2xf32>, vector<2x32xf32>, vector<16x32xf32> -> vector<16x32xf32>
    %c0_8 = arith.constant 0 : index
    %c0_9 = arith.constant 0 : index
    %16 = vector.load %arg4[%c0_8, %c0_9] : memref<64x32xf32, #tpu.memory_space<vmem>>, vector<8x32xf32>
    %17 = tpu.concatenate %16, %16 in 0 : vector<8x32xf32>, vector<8x32xf32> -> vector<16x32xf32>
    %18 = arith.addf %13, %17 : vector<16x32xf32>
    %19 = arith.addf %18, %15 : vector<16x32xf32>
    %c0_10 = arith.constant 0 : index
    %c0_11 = arith.constant 0 : index
    %20 = vector.load %arg6[%c0_10, %c0_11] : memref<1x32xf32, #tpu.memory_space<vmem>>, vector<1x32xf32>
    %c0_12 = arith.constant 0 : index
    %c0_13 = arith.constant 0 : index
    %21 = vector.load %arg7[%c0_12, %c0_13] : memref<1x32xf32, #tpu.memory_space<vmem>>, vector<1x32xf32>
    %cst_14 = arith.constant dense<0.000000e+00> : vector<16xf32>
    %22 = vector.multi_reduction <add>, %19, %cst_14 [1] : vector<16x32xf32> to vector<16xf32>
    %23 = vector.shape_cast %22 : vector<16xf32> to vector<16x1xf32>
    %cst_15 = arith.constant 3.200000e+01 : f32
    %24 = vector.broadcast %cst_15 : f32 to vector<16x1xf32>
    %25 = arith.divf %23, %24 : vector<16x1xf32>
    %26 = vector.broadcast %25 : vector<16x1xf32> to vector<16x32xf32>
    %27 = arith.subf %19, %26 : vector<16x32xf32>
    %28 = arith.mulf %27, %27 : vector<16x32xf32>
    %cst_16 = arith.constant dense<0.000000e+00> : vector<16xf32>
    %29 = vector.multi_reduction <add>, %28, %cst_16 [1] : vector<16x32xf32> to vector<16xf32>
    %30 = vector.shape_cast %29 : vector<16xf32> to vector<16x1xf32>
    %cst_17 = arith.constant 3.200000e+01 : f32
    %31 = vector.broadcast %cst_17 : f32 to vector<16x1xf32>
    %32 = arith.divf %30, %31 : vector<16x1xf32>
    %cst_18 = arith.constant 9.99999996E-13 : f32
    %33 = vector.broadcast %cst_18 : f32 to vector<16x1xf32>
    %34 = arith.addf %32, %33 : vector<16x1xf32>
    %35 = math.rsqrt %34 : vector<16x1xf32>
    %36 = vector.broadcast %35 : vector<16x1xf32> to vector<16x32xf32>
    %37 = arith.mulf %27, %36 : vector<16x32xf32>
    %38 = vector.broadcast %20 : vector<1x32xf32> to vector<16x32xf32>
    %39 = arith.mulf %37, %38 : vector<16x32xf32>
    %40 = vector.broadcast %21 : vector<1x32xf32> to vector<16x32xf32>
    %41 = arith.addf %39, %40 : vector<16x32xf32>
    %c0_19 = arith.constant 0 : index
    %c0_20 = arith.constant 0 : index
    %42 = vector.load %arg2[%c0_19, %c0_20] : memref<2x8xi32, #tpu.memory_space<vmem>>, vector<2x8xi32>
    %43 = arith.sitofp %42 : vector<2x8xi32> to vector<2x8xf32>
    %cst_21 = arith.constant 1.000000e+00 : f32
    %44 = vector.broadcast %cst_21 : f32 to vector<2x8xf32>
    %45 = arith.subf %44, %43 : vector<2x8xf32>
    %cst_22 = arith.constant -1.000000e+09 : f32
    %46 = vector.broadcast %cst_22 : f32 to vector<2x8xf32>
    %47 = arith.mulf %45, %46 : vector<2x8xf32>
    %48 = vector.extract_strided_slice %47 {offsets = [0, 0], sizes = [1, 8], strides = [1, 1]} : vector<2x8xf32> to vector<1x8xf32>
    %49 = vector.extract_strided_slice %47 {offsets = [0, 0], sizes = [1, 8], strides = [1, 1]} : vector<2x8xf32> to vector<1x8xf32>
    %50 = vector.extract_strided_slice %47 {offsets = [1, 0], sizes = [1, 8], strides = [1, 1]} : vector<2x8xf32> to vector<1x8xf32>
    %51 = vector.extract_strided_slice %47 {offsets = [1, 0], sizes = [1, 8], strides = [1, 1]} : vector<2x8xf32> to vector<1x8xf32>
    %52 = vector.shape_cast %48 : vector<1x8xf32> to vector<1x1x8xf32>
    %53 = vector.shape_cast %49 : vector<1x8xf32> to vector<1x1x8xf32>
    %54 = vector.shape_cast %50 : vector<1x8xf32> to vector<1x1x8xf32>
    %55 = vector.shape_cast %51 : vector<1x8xf32> to vector<1x1x8xf32>
    %56 = tpu.concatenate %52, %53, %54, %55 in 0 : vector<1x1x8xf32>, vector<1x1x8xf32>, vector<1x1x8xf32>, vector<1x1x8xf32> -> vector<4x1x8xf32>
    %c0_23 = arith.constant 0 : index
    %c0_24 = arith.constant 0 : index
    %c0_25 = arith.constant 0 : index
    %57 = vector.load %arg8[%c0_23, %c0_24, %c0_25] : memref<2x32x96xbf16, #tpu.memory_space<vmem>>, vector<1x32x96xbf16>
    %58 = vector.shape_cast %57 : vector<1x32x96xbf16> to vector<32x96xbf16>
    %59 = arith.truncf %41 : vector<16x32xf32> to vector<16x32xbf16>
    %cst_26 = arith.constant dense<0.000000e+00> : vector<16x96xf32>
    %60 = tpu.matmul %59, %58, %cst_26 {dimension_numbers = #tpu.dot_dimension_numbers<[1], [0], [0], [1], [0, 0, 1, 1], [], []>} : vector<16x32xbf16>, vector<32x96xbf16>, vector<16x96xf32> -> vector<16x96xf32>
    %c0_27 = arith.constant 0 : index
    %c0_28 = arith.constant 0 : index
    %c0_29 = arith.constant 0 : index
    %61 = vector.load %arg9[%c0_27, %c0_28, %c0_29] : memref<2x1x96xf32, #tpu.memory_space<vmem>>, vector<1x1x96xf32>
    %62 = vector.shape_cast %61 : vector<1x1x96xf32> to vector<1x96xf32>
    %63 = vector.broadcast %62 : vector<1x96xf32> to vector<16x96xf32>
    %64 = arith.addf %60, %63 : vector<16x96xf32>
    %65 = vector.extract_strided_slice %64 {offsets = [0, 0], sizes = [8, 16], strides = [1, 1]} : vector<16x96xf32> to vector<8x16xf32>
    %66 = vector.extract_strided_slice %64 {offsets = [0, 32], sizes = [8, 16], strides = [1, 1]} : vector<16x96xf32> to vector<8x16xf32>
    %67 = vector.extract_strided_slice %64 {offsets = [0, 64], sizes = [8, 16], strides = [1, 1]} : vector<16x96xf32> to vector<8x16xf32>
    %68 = vector.extract_strided_slice %64 {offsets = [0, 16], sizes = [8, 16], strides = [1, 1]} : vector<16x96xf32> to vector<8x16xf32>
    %69 = vector.extract_strided_slice %64 {offsets = [0, 48], sizes = [8, 16], strides = [1, 1]} : vector<16x96xf32> to vector<8x16xf32>
    %70 = vector.extract_strided_slice %64 {offsets = [0, 80], sizes = [8, 16], strides = [1, 1]} : vector<16x96xf32> to vector<8x16xf32>
    %71 = vector.extract_strided_slice %64 {offsets = [8, 0], sizes = [8, 16], strides = [1, 1]} : vector<16x96xf32> to vector<8x16xf32>
    %72 = vector.extract_strided_slice %64 {offsets = [8, 32], sizes = [8, 16], strides = [1, 1]} : vector<16x96xf32> to vector<8x16xf32>
    %73 = vector.extract_strided_slice %64 {offsets = [8, 64], sizes = [8, 16], strides = [1, 1]} : vector<16x96xf32> to vector<8x16xf32>
    %74 = vector.extract_strided_slice %64 {offsets = [8, 16], sizes = [8, 16], strides = [1, 1]} : vector<16x96xf32> to vector<8x16xf32>
    %75 = vector.extract_strided_slice %64 {offsets = [8, 48], sizes = [8, 16], strides = [1, 1]} : vector<16x96xf32> to vector<8x16xf32>
    %76 = vector.extract_strided_slice %64 {offsets = [8, 80], sizes = [8, 16], strides = [1, 1]} : vector<16x96xf32> to vector<8x16xf32>
    %77 = vector.shape_cast %65 : vector<8x16xf32> to vector<1x8x16xf32>
    %78 = vector.shape_cast %68 : vector<8x16xf32> to vector<1x8x16xf32>
    %79 = vector.shape_cast %71 : vector<8x16xf32> to vector<1x8x16xf32>
    %80 = vector.shape_cast %74 : vector<8x16xf32> to vector<1x8x16xf32>
    %81 = tpu.concatenate %77, %78, %79, %80 in 0 : vector<1x8x16xf32>, vector<1x8x16xf32>, vector<1x8x16xf32>, vector<1x8x16xf32> -> vector<4x8x16xf32>
    %82 = vector.shape_cast %66 : vector<8x16xf32> to vector<1x8x16xf32>
    %83 = vector.shape_cast %69 : vector<8x16xf32> to vector<1x8x16xf32>
    %84 = vector.shape_cast %72 : vector<8x16xf32> to vector<1x8x16xf32>
    %85 = vector.shape_cast %75 : vector<8x16xf32> to vector<1x8x16xf32>
    %86 = tpu.concatenate %82, %83, %84, %85 in 0 : vector<1x8x16xf32>, vector<1x8x16xf32>, vector<1x8x16xf32>, vector<1x8x16xf32> -> vector<4x8x16xf32>
    %87 = vector.shape_cast %67 : vector<8x16xf32> to vector<1x8x16xf32>
    %88 = vector.shape_cast %70 : vector<8x16xf32> to vector<1x8x16xf32>
    %89 = vector.shape_cast %73 : vector<8x16xf32> to vector<1x8x16xf32>
    %90 = vector.shape_cast %76 : vector<8x16xf32> to vector<1x8x16xf32>
    %91 = tpu.concatenate %87, %88, %89, %90 in 0 : vector<1x8x16xf32>, vector<1x8x16xf32>, vector<1x8x16xf32>, vector<1x8x16xf32> -> vector<4x8x16xf32>
    %92 = arith.truncf %81 : vector<4x8x16xf32> to vector<4x8x16xbf16>
    %93 = arith.truncf %86 : vector<4x8x16xf32> to vector<4x8x16xbf16>
    "tpu.trace_start"() <{level = 10 : i32, message = "bqd,bkd->bqk"}> : () -> ()
    %cst_30 = arith.constant dense<0.000000e+00> : vector<4x8x8xf32>
    %94 = tpu.matmul %92, %93, %cst_30 {dimension_numbers = #tpu.dot_dimension_numbers<[2], [2], [1], [1], [0, 0, 0, 1, 1, 1], [0], [0]>} : vector<4x8x16xbf16>, vector<4x8x16xbf16>, vector<4x8x8xf32> -> vector<4x8x8xf32>
    "tpu.trace_stop"() : () -> ()
    %cst_31 = arith.constant 2.500000e-01 : f32
    %95 = vector.broadcast %cst_31 : f32 to vector<4x8x8xf32>
    %96 = arith.mulf %94, %95 : vector<4x8x8xf32>
    %97 = vector.broadcast %56 : vector<4x1x8xf32> to vector<4x8x8xf32>
    %98 = arith.addf %96, %97 : vector<4x8x8xf32>
    %cst_32 = arith.constant dense<0xFF800000> : vector<4x8xf32>
    %99 = vector.multi_reduction <maximumf>, %98, %cst_32 [2] : vector<4x8x8xf32> to vector<4x8xf32>
    %100 = vector.shape_cast %99 : vector<4x8xf32> to vector<4x8x1xf32>
    %101 = vector.broadcast %100 : vector<4x8x1xf32> to vector<4x8x8xf32>
    %102 = arith.subf %98, %101 : vector<4x8x8xf32>
    %103 = math.exp %102 : vector<4x8x8xf32>
    %cst_33 = arith.constant dense<0.000000e+00> : vector<4x8xf32>
    %104 = vector.multi_reduction <add>, %103, %cst_33 [2] : vector<4x8x8xf32> to vector<4x8xf32>
    %105 = vector.shape_cast %104 : vector<4x8xf32> to vector<4x8x1xf32>
    %106 = tpu.reciprocal %105 {approx = true} : vector<4x8x1xf32> -> vector<4x8x1xf32>
    %107 = vector.broadcast %106 : vector<4x8x1xf32> to vector<4x8x8xf32>
    %108 = arith.mulf %103, %107 : vector<4x8x8xf32>
    %109 = arith.truncf %108 : vector<4x8x8xf32> to vector<4x8x8xbf16>
    %110 = arith.truncf %91 : vector<4x8x16xf32> to vector<4x8x16xbf16>
    "tpu.trace_start"() <{level = 10 : i32, message = "bqk,bkd->bqd"}> : () -> ()
    %cst_34 = arith.constant dense<0.000000e+00> : vector<4x8x16xf32>
    %111 = tpu.matmul %109, %110, %cst_34 {dimension_numbers = #tpu.dot_dimension_numbers<[2], [1], [1], [2], [0, 0, 0, 1, 1, 2], [0], [0]>} : vector<4x8x8xbf16>, vector<4x8x16xbf16>, vector<4x8x16xf32> -> vector<4x8x16xf32>
    "tpu.trace_stop"() : () -> ()
    %112 = vector.extract_strided_slice %111 {offsets = [0, 0, 0], sizes = [1, 8, 16], strides = [1, 1, 1]} : vector<4x8x16xf32> to vector<1x8x16xf32>
    %113 = vector.shape_cast %112 : vector<1x8x16xf32> to vector<8x16xf32>
    %114 = vector.extract_strided_slice %111 {offsets = [1, 0, 0], sizes = [1, 8, 16], strides = [1, 1, 1]} : vector<4x8x16xf32> to vector<1x8x16xf32>
    %115 = vector.shape_cast %114 : vector<1x8x16xf32> to vector<8x16xf32>
    %116 = tpu.concatenate %113, %115 in 1 : vector<8x16xf32>, vector<8x16xf32> -> vector<8x32xf32>
    %117 = vector.extract_strided_slice %111 {offsets = [2, 0, 0], sizes = [1, 8, 16], strides = [1, 1, 1]} : vector<4x8x16xf32> to vector<1x8x16xf32>
    %118 = vector.shape_cast %117 : vector<1x8x16xf32> to vector<8x16xf32>
    %119 = vector.extract_strided_slice %111 {offsets = [3, 0, 0], sizes = [1, 8, 16], strides = [1, 1, 1]} : vector<4x8x16xf32> to vector<1x8x16xf32>
    %120 = vector.shape_cast %119 : vector<1x8x16xf32> to vector<8x16xf32>
    %121 = tpu.concatenate %118, %120 in 1 : vector<8x16xf32>, vector<8x16xf32> -> vector<8x32xf32>
    %122 = tpu.concatenate %116, %121 in 0 : vector<8x32xf32>, vector<8x32xf32> -> vector<16x32xf32>
    %c0_35 = arith.constant 0 : index
    %c0_36 = arith.constant 0 : index
    %c0_37 = arith.constant 0 : index
    %123 = vector.load %arg10[%c0_35, %c0_36, %c0_37] : memref<2x32x32xbf16, #tpu.memory_space<vmem>>, vector<1x32x32xbf16>
    %124 = vector.shape_cast %123 : vector<1x32x32xbf16> to vector<32x32xbf16>
    %125 = arith.truncf %122 : vector<16x32xf32> to vector<16x32xbf16>
    %cst_38 = arith.constant dense<0.000000e+00> : vector<16x32xf32>
    %126 = tpu.matmul %125, %124, %cst_38 {dimension_numbers = #tpu.dot_dimension_numbers<[1], [0], [0], [1], [0, 0, 1, 1], [], []>} : vector<16x32xbf16>, vector<32x32xbf16>, vector<16x32xf32> -> vector<16x32xf32>
    %c0_39 = arith.constant 0 : index
    %c0_40 = arith.constant 0 : index
    %c0_41 = arith.constant 0 : index
    %127 = vector.load %arg11[%c0_39, %c0_40, %c0_41] : memref<2x1x32xf32, #tpu.memory_space<vmem>>, vector<1x1x32xf32>
    %128 = vector.shape_cast %127 : vector<1x1x32xf32> to vector<1x32xf32>
    %129 = vector.broadcast %128 : vector<1x32xf32> to vector<16x32xf32>
    %130 = arith.addf %126, %129 : vector<16x32xf32>
    %131 = arith.addf %130, %41 : vector<16x32xf32>
    %c0_42 = arith.constant 0 : index
    %c0_43 = arith.constant 0 : index
    %c0_44 = arith.constant 0 : index
    %132 = vector.load %arg12[%c0_42, %c0_43, %c0_44] : memref<2x1x32xf32, #tpu.memory_space<vmem>>, vector<1x1x32xf32>
    %133 = vector.shape_cast %132 : vector<1x1x32xf32> to vector<1x32xf32>
    %c0_45 = arith.constant 0 : index
    %c0_46 = arith.constant 0 : index
    %c0_47 = arith.constant 0 : index
    %134 = vector.load %arg13[%c0_45, %c0_46, %c0_47] : memref<2x1x32xf32, #tpu.memory_space<vmem>>, vector<1x1x32xf32>
    %135 = vector.shape_cast %134 : vector<1x1x32xf32> to vector<1x32xf32>
    %cst_48 = arith.constant dense<0.000000e+00> : vector<16xf32>
    %136 = vector.multi_reduction <add>, %131, %cst_48 [1] : vector<16x32xf32> to vector<16xf32>
    %137 = vector.shape_cast %136 : vector<16xf32> to vector<16x1xf32>
    %cst_49 = arith.constant 3.200000e+01 : f32
    %138 = vector.broadcast %cst_49 : f32 to vector<16x1xf32>
    %139 = arith.divf %137, %138 : vector<16x1xf32>
    %140 = vector.broadcast %139 : vector<16x1xf32> to vector<16x32xf32>
    %141 = arith.subf %131, %140 : vector<16x32xf32>
    %142 = arith.mulf %141, %141 : vector<16x32xf32>
    %cst_50 = arith.constant dense<0.000000e+00> : vector<16xf32>
    %143 = vector.multi_reduction <add>, %142, %cst_50 [1] : vector<16x32xf32> to vector<16xf32>
    %144 = vector.shape_cast %143 : vector<16xf32> to vector<16x1xf32>
    %cst_51 = arith.constant 3.200000e+01 : f32
    %145 = vector.broadcast %cst_51 : f32 to vector<16x1xf32>
    %146 = arith.divf %144, %145 : vector<16x1xf32>
    %cst_52 = arith.constant 9.99999996E-13 : f32
    %147 = vector.broadcast %cst_52 : f32 to vector<16x1xf32>
    %148 = arith.addf %146, %147 : vector<16x1xf32>
    %149 = math.rsqrt %148 : vector<16x1xf32>
    %150 = vector.broadcast %149 : vector<16x1xf32> to vector<16x32xf32>
    %151 = arith.mulf %141, %150 : vector<16x32xf32>
    %152 = vector.broadcast %133 : vector<1x32xf32> to vector<16x32xf32>
    %153 = arith.mulf %151, %152 : vector<16x32xf32>
    %154 = vector.broadcast %135 : vector<1x32xf32> to vector<16x32xf32>
    %155 = arith.addf %153, %154 : vector<16x32xf32>
    %c0_53 = arith.constant 0 : index
    %c0_54 = arith.constant 0 : index
    %c0_55 = arith.constant 0 : index
    %156 = vector.load %arg14[%c0_53, %c0_54, %c0_55] : memref<2x32x64xbf16, #tpu.memory_space<vmem>>, vector<1x32x64xbf16>
    %157 = vector.shape_cast %156 : vector<1x32x64xbf16> to vector<32x64xbf16>
    %158 = arith.truncf %155 : vector<16x32xf32> to vector<16x32xbf16>
    %cst_56 = arith.constant dense<0.000000e+00> : vector<16x64xf32>
    %159 = tpu.matmul %158, %157, %cst_56 {dimension_numbers = #tpu.dot_dimension_numbers<[1], [0], [0], [1], [0, 0, 1, 1], [], []>} : vector<16x32xbf16>, vector<32x64xbf16>, vector<16x64xf32> -> vector<16x64xf32>
    %c0_57 = arith.constant 0 : index
    %c0_58 = arith.constant 0 : index
    %c0_59 = arith.constant 0 : index
    %160 = vector.load %arg15[%c0_57, %c0_58, %c0_59] : memref<2x1x64xf32, #tpu.memory_space<vmem>>, vector<1x1x64xf32>
    %161 = vector.shape_cast %160 : vector<1x1x64xf32> to vector<1x64xf32>
    %162 = vector.broadcast %161 : vector<1x64xf32> to vector<16x64xf32>
    %163 = arith.addf %159, %162 : vector<16x64xf32>
    %cst_60 = arith.constant 5.000000e-01 : f32
    %164 = vector.broadcast %cst_60 : f32 to vector<16x64xf32>
    %165 = arith.mulf %164, %163 : vector<16x64xf32>
    %cst_61 = arith.constant 4.471500e-02 : f32
    %166 = vector.broadcast %cst_61 : f32 to vector<16x64xf32>
    %167 = arith.mulf %166, %163 : vector<16x64xf32>
    %168 = arith.mulf %167, %163 : vector<16x64xf32>
    %169 = arith.mulf %168, %163 : vector<16x64xf32>
    %170 = arith.addf %163, %169 : vector<16x64xf32>
    %cst_62 = arith.constant 0.797884583 : f32
    %171 = vector.broadcast %cst_62 : f32 to vector<16x64xf32>
    %172 = arith.mulf %171, %170 : vector<16x64xf32>
    %173 = math.tanh %172 : vector<16x64xf32>
    %cst_63 = arith.constant 1.000000e+00 : f32
    %174 = vector.broadcast %cst_63 : f32 to vector<16x64xf32>
    %175 = arith.addf %174, %173 : vector<16x64xf32>
    %176 = arith.mulf %165, %175 : vector<16x64xf32>
    %c0_64 = arith.constant 0 : index
    %c0_65 = arith.constant 0 : index
    %c0_66 = arith.constant 0 : index
    %177 = vector.load %arg16[%c0_64, %c0_65, %c0_66] : memref<2x64x32xbf16, #tpu.memory_space<vmem>>, vector<1x64x32xbf16>
    %178 = vector.shape_cast %177 : vector<1x64x32xbf16> to vector<64x32xbf16>
    %179 = arith.truncf %176 : vector<16x64xf32> to vector<16x64xbf16>
    %cst_67 = arith.constant dense<0.000000e+00> : vector<16x32xf32>
    %180 = tpu.matmul %179, %178, %cst_67 {dimension_numbers = #tpu.dot_dimension_numbers<[1], [0], [0], [1], [0, 0, 1, 1], [], []>} : vector<16x64xbf16>, vector<64x32xbf16>, vector<16x32xf32> -> vector<16x32xf32>
    %c0_68 = arith.constant 0 : index
    %c0_69 = arith.constant 0 : index
    %c0_70 = arith.constant 0 : index
    %181 = vector.load %arg17[%c0_68, %c0_69, %c0_70] : memref<2x1x32xf32, #tpu.memory_space<vmem>>, vector<1x1x32xf32>
    %182 = vector.shape_cast %181 : vector<1x1x32xf32> to vector<1x32xf32>
    %183 = vector.broadcast %182 : vector<1x32xf32> to vector<16x32xf32>
    %184 = arith.addf %180, %183 : vector<16x32xf32>
    %185 = arith.addf %184, %155 : vector<16x32xf32>
    %c0_71 = arith.constant 0 : index
    %c0_72 = arith.constant 0 : index
    %c0_73 = arith.constant 0 : index
    %186 = vector.load %arg18[%c0_71, %c0_72, %c0_73] : memref<2x1x32xf32, #tpu.memory_space<vmem>>, vector<1x1x32xf32>
    %187 = vector.shape_cast %186 : vector<1x1x32xf32> to vector<1x32xf32>
    %c0_74 = arith.constant 0 : index
    %c0_75 = arith.constant 0 : index
    %c0_76 = arith.constant 0 : index
    %188 = vector.load %arg19[%c0_74, %c0_75, %c0_76] : memref<2x1x32xf32, #tpu.memory_space<vmem>>, vector<1x1x32xf32>
    %189 = vector.shape_cast %188 : vector<1x1x32xf32> to vector<1x32xf32>
    %cst_77 = arith.constant dense<0.000000e+00> : vector<16xf32>
    %190 = vector.multi_reduction <add>, %185, %cst_77 [1] : vector<16x32xf32> to vector<16xf32>
    %191 = vector.shape_cast %190 : vector<16xf32> to vector<16x1xf32>
    %cst_78 = arith.constant 3.200000e+01 : f32
    %192 = vector.broadcast %cst_78 : f32 to vector<16x1xf32>
    %193 = arith.divf %191, %192 : vector<16x1xf32>
    %194 = vector.broadcast %193 : vector<16x1xf32> to vector<16x32xf32>
    %195 = arith.subf %185, %194 : vector<16x32xf32>
    %196 = arith.mulf %195, %195 : vector<16x32xf32>
    %cst_79 = arith.constant dense<0.000000e+00> : vector<16xf32>
    %197 = vector.multi_reduction <add>, %196, %cst_79 [1] : vector<16x32xf32> to vector<16xf32>
    %198 = vector.shape_cast %197 : vector<16xf32> to vector<16x1xf32>
    %cst_80 = arith.constant 3.200000e+01 : f32
    %199 = vector.broadcast %cst_80 : f32 to vector<16x1xf32>
    %200 = arith.divf %198, %199 : vector<16x1xf32>
    %cst_81 = arith.constant 9.99999996E-13 : f32
    %201 = vector.broadcast %cst_81 : f32 to vector<16x1xf32>
    %202 = arith.addf %200, %201 : vector<16x1xf32>
    %203 = math.rsqrt %202 : vector<16x1xf32>
    %204 = vector.broadcast %203 : vector<16x1xf32> to vector<16x32xf32>
    %205 = arith.mulf %195, %204 : vector<16x32xf32>
    %206 = vector.broadcast %187 : vector<1x32xf32> to vector<16x32xf32>
    %207 = arith.mulf %205, %206 : vector<16x32xf32>
    %208 = vector.broadcast %189 : vector<1x32xf32> to vector<16x32xf32>
    %209 = arith.addf %207, %208 : vector<16x32xf32>
    %c1 = arith.constant 1 : index
    %c0_82 = arith.constant 0 : index
    %c0_83 = arith.constant 0 : index
    %210 = vector.load %arg8[%c1, %c0_82, %c0_83] : memref<2x32x96xbf16, #tpu.memory_space<vmem>>, vector<1x32x96xbf16>
    %211 = vector.shape_cast %210 : vector<1x32x96xbf16> to vector<32x96xbf16>
    %212 = arith.truncf %209 : vector<16x32xf32> to vector<16x32xbf16>
    %cst_84 = arith.constant dense<0.000000e+00> : vector<16x96xf32>
    %213 = tpu.matmul %212, %211, %cst_84 {dimension_numbers = #tpu.dot_dimension_numbers<[1], [0], [0], [1], [0, 0, 1, 1], [], []>} : vector<16x32xbf16>, vector<32x96xbf16>, vector<16x96xf32> -> vector<16x96xf32>
    %c1_85 = arith.constant 1 : index
    %c0_86 = arith.constant 0 : index
    %c0_87 = arith.constant 0 : index
    %214 = vector.load %arg9[%c1_85, %c0_86, %c0_87] : memref<2x1x96xf32, #tpu.memory_space<vmem>>, vector<1x1x96xf32>
    %215 = vector.shape_cast %214 : vector<1x1x96xf32> to vector<1x96xf32>
    %216 = vector.broadcast %215 : vector<1x96xf32> to vector<16x96xf32>
    %217 = arith.addf %213, %216 : vector<16x96xf32>
    %218 = vector.extract_strided_slice %217 {offsets = [0, 0], sizes = [8, 16], strides = [1, 1]} : vector<16x96xf32> to vector<8x16xf32>
    %219 = vector.extract_strided_slice %217 {offsets = [0, 32], sizes = [8, 16], strides = [1, 1]} : vector<16x96xf32> to vector<8x16xf32>
    %220 = vector.extract_strided_slice %217 {offsets = [0, 64], sizes = [8, 16], strides = [1, 1]} : vector<16x96xf32> to vector<8x16xf32>
    %221 = vector.extract_strided_slice %217 {offsets = [0, 16], sizes = [8, 16], strides = [1, 1]} : vector<16x96xf32> to vector<8x16xf32>
    %222 = vector.extract_strided_slice %217 {offsets = [0, 48], sizes = [8, 16], strides = [1, 1]} : vector<16x96xf32> to vector<8x16xf32>
    %223 = vector.extract_strided_slice %217 {offsets = [0, 80], sizes = [8, 16], strides = [1, 1]} : vector<16x96xf32> to vector<8x16xf32>
    %224 = vector.extract_strided_slice %217 {offsets = [8, 0], sizes = [8, 16], strides = [1, 1]} : vector<16x96xf32> to vector<8x16xf32>
    %225 = vector.extract_strided_slice %217 {offsets = [8, 32], sizes = [8, 16], strides = [1, 1]} : vector<16x96xf32> to vector<8x16xf32>
    %226 = vector.extract_strided_slice %217 {offsets = [8, 64], sizes = [8, 16], strides = [1, 1]} : vector<16x96xf32> to vector<8x16xf32>
    %227 = vector.extract_strided_slice %217 {offsets = [8, 16], sizes = [8, 16], strides = [1, 1]} : vector<16x96xf32> to vector<8x16xf32>
    %228 = vector.extract_strided_slice %217 {offsets = [8, 48], sizes = [8, 16], strides = [1, 1]} : vector<16x96xf32> to vector<8x16xf32>
    %229 = vector.extract_strided_slice %217 {offsets = [8, 80], sizes = [8, 16], strides = [1, 1]} : vector<16x96xf32> to vector<8x16xf32>
    %230 = vector.shape_cast %218 : vector<8x16xf32> to vector<1x8x16xf32>
    %231 = vector.shape_cast %221 : vector<8x16xf32> to vector<1x8x16xf32>
    %232 = vector.shape_cast %224 : vector<8x16xf32> to vector<1x8x16xf32>
    %233 = vector.shape_cast %227 : vector<8x16xf32> to vector<1x8x16xf32>
    %234 = tpu.concatenate %230, %231, %232, %233 in 0 : vector<1x8x16xf32>, vector<1x8x16xf32>, vector<1x8x16xf32>, vector<1x8x16xf32> -> vector<4x8x16xf32>
    %235 = vector.shape_cast %219 : vector<8x16xf32> to vector<1x8x16xf32>
    %236 = vector.shape_cast %222 : vector<8x16xf32> to vector<1x8x16xf32>
    %237 = vector.shape_cast %225 : vector<8x16xf32> to vector<1x8x16xf32>
    %238 = vector.shape_cast %228 : vector<8x16xf32> to vector<1x8x16xf32>
    %239 = tpu.concatenate %235, %236, %237, %238 in 0 : vector<1x8x16xf32>, vector<1x8x16xf32>, vector<1x8x16xf32>, vector<1x8x16xf32> -> vector<4x8x16xf32>
    %240 = vector.shape_cast %220 : vector<8x16xf32> to vector<1x8x16xf32>
    %241 = vector.shape_cast %223 : vector<8x16xf32> to vector<1x8x16xf32>
    %242 = vector.shape_cast %226 : vector<8x16xf32> to vector<1x8x16xf32>
    %243 = vector.shape_cast %229 : vector<8x16xf32> to vector<1x8x16xf32>
    %244 = tpu.concatenate %240, %241, %242, %243 in 0 : vector<1x8x16xf32>, vector<1x8x16xf32>, vector<1x8x16xf32>, vector<1x8x16xf32> -> vector<4x8x16xf32>
    %245 = arith.truncf %234 : vector<4x8x16xf32> to vector<4x8x16xbf16>
    %246 = arith.truncf %239 : vector<4x8x16xf32> to vector<4x8x16xbf16>
    "tpu.trace_start"() <{level = 10 : i32, message = "bqd,bkd->bqk"}> : () -> ()
    %cst_88 = arith.constant dense<0.000000e+00> : vector<4x8x8xf32>
    %247 = tpu.matmul %245, %246, %cst_88 {dimension_numbers = #tpu.dot_dimension_numbers<[2], [2], [1], [1], [0, 0, 0, 1, 1, 1], [0], [0]>} : vector<4x8x16xbf16>, vector<4x8x16xbf16>, vector<4x8x8xf32> -> vector<4x8x8xf32>
    "tpu.trace_stop"() : () -> ()
    %cst_89 = arith.constant 2.500000e-01 : f32
    %248 = vector.broadcast %cst_89 : f32 to vector<4x8x8xf32>
    %249 = arith.mulf %247, %248 : vector<4x8x8xf32>
    %250 = vector.broadcast %56 : vector<4x1x8xf32> to vector<4x8x8xf32>
    %251 = arith.addf %249, %250 : vector<4x8x8xf32>
    %cst_90 = arith.constant dense<0xFF800000> : vector<4x8xf32>
    %252 = vector.multi_reduction <maximumf>, %251, %cst_90 [2] : vector<4x8x8xf32> to vector<4x8xf32>
    %253 = vector.shape_cast %252 : vector<4x8xf32> to vector<4x8x1xf32>
    %254 = vector.broadcast %253 : vector<4x8x1xf32> to vector<4x8x8xf32>
    %255 = arith.subf %251, %254 : vector<4x8x8xf32>
    %256 = math.exp %255 : vector<4x8x8xf32>
    %cst_91 = arith.constant dense<0.000000e+00> : vector<4x8xf32>
    %257 = vector.multi_reduction <add>, %256, %cst_91 [2] : vector<4x8x8xf32> to vector<4x8xf32>
    %258 = vector.shape_cast %257 : vector<4x8xf32> to vector<4x8x1xf32>
    %259 = tpu.reciprocal %258 {approx = true} : vector<4x8x1xf32> -> vector<4x8x1xf32>
    %260 = vector.broadcast %259 : vector<4x8x1xf32> to vector<4x8x8xf32>
    %261 = arith.mulf %256, %260 : vector<4x8x8xf32>
    %262 = arith.truncf %261 : vector<4x8x8xf32> to vector<4x8x8xbf16>
    %263 = arith.truncf %244 : vector<4x8x16xf32> to vector<4x8x16xbf16>
    "tpu.trace_start"() <{level = 10 : i32, message = "bqk,bkd->bqd"}> : () -> ()
    %cst_92 = arith.constant dense<0.000000e+00> : vector<4x8x16xf32>
    %264 = tpu.matmul %262, %263, %cst_92 {dimension_numbers = #tpu.dot_dimension_numbers<[2], [1], [1], [2], [0, 0, 0, 1, 1, 2], [0], [0]>} : vector<4x8x8xbf16>, vector<4x8x16xbf16>, vector<4x8x16xf32> -> vector<4x8x16xf32>
    "tpu.trace_stop"() : () -> ()
    %265 = vector.extract_strided_slice %264 {offsets = [0, 0, 0], sizes = [1, 8, 16], strides = [1, 1, 1]} : vector<4x8x16xf32> to vector<1x8x16xf32>
    %266 = vector.shape_cast %265 : vector<1x8x16xf32> to vector<8x16xf32>
    %267 = vector.extract_strided_slice %264 {offsets = [1, 0, 0], sizes = [1, 8, 16], strides = [1, 1, 1]} : vector<4x8x16xf32> to vector<1x8x16xf32>
    %268 = vector.shape_cast %267 : vector<1x8x16xf32> to vector<8x16xf32>
    %269 = tpu.concatenate %266, %268 in 1 : vector<8x16xf32>, vector<8x16xf32> -> vector<8x32xf32>
    %270 = vector.extract_strided_slice %264 {offsets = [2, 0, 0], sizes = [1, 8, 16], strides = [1, 1, 1]} : vector<4x8x16xf32> to vector<1x8x16xf32>
    %271 = vector.shape_cast %270 : vector<1x8x16xf32> to vector<8x16xf32>
    %272 = vector.extract_strided_slice %264 {offsets = [3, 0, 0], sizes = [1, 8, 16], strides = [1, 1, 1]} : vector<4x8x16xf32> to vector<1x8x16xf32>
    %273 = vector.shape_cast %272 : vector<1x8x16xf32> to vector<8x16xf32>
    %274 = tpu.concatenate %271, %273 in 1 : vector<8x16xf32>, vector<8x16xf32> -> vector<8x32xf32>
    %275 = tpu.concatenate %269, %274 in 0 : vector<8x32xf32>, vector<8x32xf32> -> vector<16x32xf32>
    %c1_93 = arith.constant 1 : index
    %c0_94 = arith.constant 0 : index
    %c0_95 = arith.constant 0 : index
    %276 = vector.load %arg10[%c1_93, %c0_94, %c0_95] : memref<2x32x32xbf16, #tpu.memory_space<vmem>>, vector<1x32x32xbf16>
    %277 = vector.shape_cast %276 : vector<1x32x32xbf16> to vector<32x32xbf16>
    %278 = arith.truncf %275 : vector<16x32xf32> to vector<16x32xbf16>
    %cst_96 = arith.constant dense<0.000000e+00> : vector<16x32xf32>
    %279 = tpu.matmul %278, %277, %cst_96 {dimension_numbers = #tpu.dot_dimension_numbers<[1], [0], [0], [1], [0, 0, 1, 1], [], []>} : vector<16x32xbf16>, vector<32x32xbf16>, vector<16x32xf32> -> vector<16x32xf32>
    %c1_97 = arith.constant 1 : index
    %c0_98 = arith.constant 0 : index
    %c0_99 = arith.constant 0 : index
    %280 = vector.load %arg11[%c1_97, %c0_98, %c0_99] : memref<2x1x32xf32, #tpu.memory_space<vmem>>, vector<1x1x32xf32>
    %281 = vector.shape_cast %280 : vector<1x1x32xf32> to vector<1x32xf32>
    %282 = vector.broadcast %281 : vector<1x32xf32> to vector<16x32xf32>
    %283 = arith.addf %279, %282 : vector<16x32xf32>
    %284 = arith.addf %283, %209 : vector<16x32xf32>
    %c1_100 = arith.constant 1 : index
    %c0_101 = arith.constant 0 : index
    %c0_102 = arith.constant 0 : index
    %285 = vector.load %arg12[%c1_100, %c0_101, %c0_102] : memref<2x1x32xf32, #tpu.memory_space<vmem>>, vector<1x1x32xf32>
    %286 = vector.shape_cast %285 : vector<1x1x32xf32> to vector<1x32xf32>
    %c1_103 = arith.constant 1 : index
    %c0_104 = arith.constant 0 : index
    %c0_105 = arith.constant 0 : index
    %287 = vector.load %arg13[%c1_103, %c0_104, %c0_105] : memref<2x1x32xf32, #tpu.memory_space<vmem>>, vector<1x1x32xf32>
    %288 = vector.shape_cast %287 : vector<1x1x32xf32> to vector<1x32xf32>
    %cst_106 = arith.constant dense<0.000000e+00> : vector<16xf32>
    %289 = vector.multi_reduction <add>, %284, %cst_106 [1] : vector<16x32xf32> to vector<16xf32>
    %290 = vector.shape_cast %289 : vector<16xf32> to vector<16x1xf32>
    %cst_107 = arith.constant 3.200000e+01 : f32
    %291 = vector.broadcast %cst_107 : f32 to vector<16x1xf32>
    %292 = arith.divf %290, %291 : vector<16x1xf32>
    %293 = vector.broadcast %292 : vector<16x1xf32> to vector<16x32xf32>
    %294 = arith.subf %284, %293 : vector<16x32xf32>
    %295 = arith.mulf %294, %294 : vector<16x32xf32>
    %cst_108 = arith.constant dense<0.000000e+00> : vector<16xf32>
    %296 = vector.multi_reduction <add>, %295, %cst_108 [1] : vector<16x32xf32> to vector<16xf32>
    %297 = vector.shape_cast %296 : vector<16xf32> to vector<16x1xf32>
    %cst_109 = arith.constant 3.200000e+01 : f32
    %298 = vector.broadcast %cst_109 : f32 to vector<16x1xf32>
    %299 = arith.divf %297, %298 : vector<16x1xf32>
    %cst_110 = arith.constant 9.99999996E-13 : f32
    %300 = vector.broadcast %cst_110 : f32 to vector<16x1xf32>
    %301 = arith.addf %299, %300 : vector<16x1xf32>
    %302 = math.rsqrt %301 : vector<16x1xf32>
    %303 = vector.broadcast %302 : vector<16x1xf32> to vector<16x32xf32>
    %304 = arith.mulf %294, %303 : vector<16x32xf32>
    %305 = vector.broadcast %286 : vector<1x32xf32> to vector<16x32xf32>
    %306 = arith.mulf %304, %305 : vector<16x32xf32>
    %307 = vector.broadcast %288 : vector<1x32xf32> to vector<16x32xf32>
    %308 = arith.addf %306, %307 : vector<16x32xf32>
    %c1_111 = arith.constant 1 : index
    %c0_112 = arith.constant 0 : index
    %c0_113 = arith.constant 0 : index
    %309 = vector.load %arg14[%c1_111, %c0_112, %c0_113] : memref<2x32x64xbf16, #tpu.memory_space<vmem>>, vector<1x32x64xbf16>
    %310 = vector.shape_cast %309 : vector<1x32x64xbf16> to vector<32x64xbf16>
    %311 = arith.truncf %308 : vector<16x32xf32> to vector<16x32xbf16>
    %cst_114 = arith.constant dense<0.000000e+00> : vector<16x64xf32>
    %312 = tpu.matmul %311, %310, %cst_114 {dimension_numbers = #tpu.dot_dimension_numbers<[1], [0], [0], [1], [0, 0, 1, 1], [], []>} : vector<16x32xbf16>, vector<32x64xbf16>, vector<16x64xf32> -> vector<16x64xf32>
    %c1_115 = arith.constant 1 : index
    %c0_116 = arith.constant 0 : index
    %c0_117 = arith.constant 0 : index
    %313 = vector.load %arg15[%c1_115, %c0_116, %c0_117] : memref<2x1x64xf32, #tpu.memory_space<vmem>>, vector<1x1x64xf32>
    %314 = vector.shape_cast %313 : vector<1x1x64xf32> to vector<1x64xf32>
    %315 = vector.broadcast %314 : vector<1x64xf32> to vector<16x64xf32>
    %316 = arith.addf %312, %315 : vector<16x64xf32>
    %cst_118 = arith.constant 5.000000e-01 : f32
    %317 = vector.broadcast %cst_118 : f32 to vector<16x64xf32>
    %318 = arith.mulf %317, %316 : vector<16x64xf32>
    %cst_119 = arith.constant 4.471500e-02 : f32
    %319 = vector.broadcast %cst_119 : f32 to vector<16x64xf32>
    %320 = arith.mulf %319, %316 : vector<16x64xf32>
    %321 = arith.mulf %320, %316 : vector<16x64xf32>
    %322 = arith.mulf %321, %316 : vector<16x64xf32>
    %323 = arith.addf %316, %322 : vector<16x64xf32>
    %cst_120 = arith.constant 0.797884583 : f32
    %324 = vector.broadcast %cst_120 : f32 to vector<16x64xf32>
    %325 = arith.mulf %324, %323 : vector<16x64xf32>
    %326 = math.tanh %325 : vector<16x64xf32>
    %cst_121 = arith.constant 1.000000e+00 : f32
    %327 = vector.broadcast %cst_121 : f32 to vector<16x64xf32>
    %328 = arith.addf %327, %326 : vector<16x64xf32>
    %329 = arith.mulf %318, %328 : vector<16x64xf32>
    %c1_122 = arith.constant 1 : index
    %c0_123 = arith.constant 0 : index
    %c0_124 = arith.constant 0 : index
    %330 = vector.load %arg16[%c1_122, %c0_123, %c0_124] : memref<2x64x32xbf16, #tpu.memory_space<vmem>>, vector<1x64x32xbf16>
    %331 = vector.shape_cast %330 : vector<1x64x32xbf16> to vector<64x32xbf16>
    %332 = arith.truncf %329 : vector<16x64xf32> to vector<16x64xbf16>
    %cst_125 = arith.constant dense<0.000000e+00> : vector<16x32xf32>
    %333 = tpu.matmul %332, %331, %cst_125 {dimension_numbers = #tpu.dot_dimension_numbers<[1], [0], [0], [1], [0, 0, 1, 1], [], []>} : vector<16x64xbf16>, vector<64x32xbf16>, vector<16x32xf32> -> vector<16x32xf32>
    %c1_126 = arith.constant 1 : index
    %c0_127 = arith.constant 0 : index
    %c0_128 = arith.constant 0 : index
    %334 = vector.load %arg17[%c1_126, %c0_127, %c0_128] : memref<2x1x32xf32, #tpu.memory_space<vmem>>, vector<1x1x32xf32>
    %335 = vector.shape_cast %334 : vector<1x1x32xf32> to vector<1x32xf32>
    %336 = vector.broadcast %335 : vector<1x32xf32> to vector<16x32xf32>
    %337 = arith.addf %333, %336 : vector<16x32xf32>
    %338 = arith.addf %337, %308 : vector<16x32xf32>
    %c1_129 = arith.constant 1 : index
    %c0_130 = arith.constant 0 : index
    %c0_131 = arith.constant 0 : index
    %339 = vector.load %arg18[%c1_129, %c0_130, %c0_131] : memref<2x1x32xf32, #tpu.memory_space<vmem>>, vector<1x1x32xf32>
    %340 = vector.shape_cast %339 : vector<1x1x32xf32> to vector<1x32xf32>
    %c1_132 = arith.constant 1 : index
    %c0_133 = arith.constant 0 : index
    %c0_134 = arith.constant 0 : index
    %341 = vector.load %arg19[%c1_132, %c0_133, %c0_134] : memref<2x1x32xf32, #tpu.memory_space<vmem>>, vector<1x1x32xf32>
    %342 = vector.shape_cast %341 : vector<1x1x32xf32> to vector<1x32xf32>
    %cst_135 = arith.constant dense<0.000000e+00> : vector<16xf32>
    %343 = vector.multi_reduction <add>, %338, %cst_135 [1] : vector<16x32xf32> to vector<16xf32>
    %344 = vector.shape_cast %343 : vector<16xf32> to vector<16x1xf32>
    %cst_136 = arith.constant 3.200000e+01 : f32
    %345 = vector.broadcast %cst_136 : f32 to vector<16x1xf32>
    %346 = arith.divf %344, %345 : vector<16x1xf32>
    %347 = vector.broadcast %346 : vector<16x1xf32> to vector<16x32xf32>
    %348 = arith.subf %338, %347 : vector<16x32xf32>
    %349 = arith.mulf %348, %348 : vector<16x32xf32>
    %cst_137 = arith.constant dense<0.000000e+00> : vector<16xf32>
    %350 = vector.multi_reduction <add>, %349, %cst_137 [1] : vector<16x32xf32> to vector<16xf32>
    %351 = vector.shape_cast %350 : vector<16xf32> to vector<16x1xf32>
    %cst_138 = arith.constant 3.200000e+01 : f32
    %352 = vector.broadcast %cst_138 : f32 to vector<16x1xf32>
    %353 = arith.divf %351, %352 : vector<16x1xf32>
    %cst_139 = arith.constant 9.99999996E-13 : f32
    %354 = vector.broadcast %cst_139 : f32 to vector<16x1xf32>
    %355 = arith.addf %353, %354 : vector<16x1xf32>
    %356 = math.rsqrt %355 : vector<16x1xf32>
    %357 = vector.broadcast %356 : vector<16x1xf32> to vector<16x32xf32>
    %358 = arith.mulf %348, %357 : vector<16x32xf32>
    %359 = vector.broadcast %340 : vector<1x32xf32> to vector<16x32xf32>
    %360 = arith.mulf %358, %359 : vector<16x32xf32>
    %361 = vector.broadcast %342 : vector<1x32xf32> to vector<16x32xf32>
    %362 = arith.addf %360, %361 : vector<16x32xf32>
    %c0_140 = arith.constant 0 : index
    %c0_141 = arith.constant 0 : index
    %363 = vector.load %arg22[%c0_140, %c0_141] : memref<16x32xf32, #tpu.memory_space<vmem>>, vector<16x32xf32>
    tpu.vector_store %arg22[%c0_140, %c0_141], %362 {strides = array<i32>} : memref<16x32xf32, #tpu.memory_space<vmem>>, vector<16x32xf32>,
    %c0_142 = arith.constant 0 : index
    %c0_143 = arith.constant 0 : index
    %364 = tpu.strided_load %arg22[%c0_142, %c0_143] {strides = array<i32: 8, 1>} : memref<16x32xf32, #tpu.memory_space<vmem>>, vector<2x32xf32>
    %c0_144 = arith.constant 0 : index
    %c0_145 = arith.constant 0 : index
    %365 = vector.load %arg20[%c0_144, %c0_145] : memref<32x32xbf16, #tpu.memory_space<vmem>>, vector<32x32xbf16>
    %366 = arith.truncf %364 : vector<2x32xf32> to vector<2x32xbf16>
    %cst_146 = arith.constant dense<0.000000e+00> : vector<2x32xf32>
    %367 = tpu.matmul %366, %365, %cst_146 {dimension_numbers = #tpu.dot_dimension_numbers<[1], [0], [0], [1], [0, 0, 1, 1], [], []>} : vector<2x32xbf16>, vector<32x32xbf16>, vector<2x32xf32> -> vector<2x32xf32>
    %c0_147 = arith.constant 0 : index
    %c0_148 = arith.constant 0 : index
    %368 = vector.load %arg21[%c0_147, %c0_148] : memref<1x32xf32, #tpu.memory_space<vmem>>, vector<1x32xf32>
    %369 = vector.broadcast %368 : vector<1x32xf32> to vector<2x32xf32>
    %370 = arith.addf %367, %369 : vector<2x32xf32>
    %371 = math.tanh %370 : vector<2x32xf32>
    %c0_149 = arith.constant 0 : index
    %c0_150 = arith.constant 0 : index
    %372 = vector.load %arg23[%c0_149, %c0_150] : memref<2x32xf32, #tpu.memory_space<vmem>>, vector<2x32xf32>
    tpu.vector_store %arg23[%c0_149, %c0_150], %371 {strides = array<i32>} : memref<2x32xf32, #tpu.memory_space<vmem>>, vector<2x32xf32>,
    return
  }
}

</mosaic_0001>

<llo_original>
// kernel: bert_forward.1
$region0: #{bert_forward.1}
  #allocation0 [shape = 'u32[]', space=smem, size = 0x4, offset = 0x4, fixed_abs, tag = 'smem constant byte address 0x4 - core index']
  #allocation1 [shape = 'u32[144,128]{1,0:T(1,128)}', space=vmem, size = 0x12000, scoped, tag = 'internal scratch']
  %s0 = inlined_call_operand.vmem [shape: s32[16,1], index: 0, kind: input, shape index: {}]
  %s1 = inlined_call_operand.vmem [shape: s32[16,1], index: 1, kind: input, shape index: {}]
  %s2 = inlined_call_operand.vmem [shape: s32[2,8], index: 2, kind: input, shape index: {}]
  %s3 = inlined_call_operand.vmem [shape: f32[100,32], index: 3, kind: input, shape index: {}]
  %s4 = inlined_call_operand.vmem [shape: f32[64,32], index: 4, kind: input, shape index: {}]
  %s5 = inlined_call_operand.vmem [shape: f32[2,32], index: 5, kind: input, shape index: {}]
  %s6 = inlined_call_operand.vmem [shape: f32[1,32], index: 6, kind: input, shape index: {}]
  %s7 = inlined_call_operand.vmem [shape: f32[1,32], index: 7, kind: input, shape index: {}]
  %s8 = inlined_call_operand.vmem [shape: bf16[2,32,96], index: 8, kind: input, shape index: {}]
  %s9 = inlined_call_operand.vmem [shape: f32[2,1,96], index: 9, kind: input, shape index: {}]
  %s10 = inlined_call_operand.vmem [shape: bf16[2,32,32], index: 10, kind: input, shape index: {}]
  %s11 = inlined_call_operand.vmem [shape: f32[2,1,32], index: 11, kind: input, shape index: {}]
  %s12 = inlined_call_operand.vmem [shape: f32[2,1,32], index: 12, kind: input, shape index: {}]
  %s13 = inlined_call_operand.vmem [shape: f32[2,1,32], index: 13, kind: input, shape index: {}]
  %s14 = inlined_call_operand.vmem [shape: bf16[2,32,64], index: 14, kind: input, shape index: {}]
  %s15 = inlined_call_operand.vmem [shape: f32[2,1,64], index: 15, kind: input, shape index: {}]
  %s16 = inlined_call_operand.vmem [shape: bf16[2,64,32], index: 16, kind: input, shape index: {}]
  %s17 = inlined_call_operand.vmem [shape: f32[2,1,32], index: 17, kind: input, shape index: {}]
  %s18 = inlined_call_operand.vmem [shape: f32[2,1,32], index: 18, kind: input, shape index: {}]
  %s19 = inlined_call_operand.vmem [shape: f32[2,1,32], index: 19, kind: input, shape index: {}]
  %s20 = inlined_call_operand.vmem [shape: bf16[32,32], index: 20, kind: input, shape index: {}]
  %s21 = inlined_call_operand.vmem [shape: f32[1,32], index: 21, kind: input, shape index: {}]
  %s22 = inlined_call_operand.hbm [shape: f32[16,32], index: 22, kind: output, shape index: {0}]
  %s23 = inlined_call_operand.hbm [shape: f32[2,32], index: 23, kind: output, shape index: {1}]
  %24 = xla_tuple %s22, %s23
  %s25 = sld [smem:[#allocation0]]
  $region106: #{bert_forward.1} parent=0
    _
  %s27 = ssub.s32 1, %s25
  %s28 = scalar_select 0, %s27, %s25
  $region1: #{bert_forward.1} parent=0
    #allocation2 [shape = 'u8[8192]{0}', space=vmem, size = 0x2000, scoped, tag = 'output window, operand 0, single buffered']
    #allocation3 [shape = 's32[1]{0}', space=sflag, size = 0x4, scoped, tag = 'scoped memory for bert_forward.1']
    #allocation4 [shape = 'u8[1024]{0}', space=vmem, size = 0x400, scoped, tag = 'output window, operand 1, single buffered']
    #allocation5 [shape = 's32[1]{0}', space=sflag, size = 0x4, scoped, tag = 'scoped memory for bert_forward.1']
    %29 = vsyncpa [#allocation3], 0
    %30 = vsyncpa [#allocation5], 0
    // Predicated region
    $region2: #{bert_forward.1} parent=1 // pred_check
      _
    $region3: #{bert_forward.1} parent=1 // pred_check_branch
      %32 = sbr.rel (0) target = $region5
    $region4: #{bert_forward.1} parent=1 // pred_region
      _
    $region5: #{bert_forward.1} parent=1 // pred_fallthru
      _
    // Predicated region
    $region6: #{bert_forward.1} parent=1 // pred_check
      _
    $region7: #{bert_forward.1} parent=1 // pred_check_branch
      %34 = sbr.rel (0) target = $region9
    $region8: #{bert_forward.1} parent=1 // pred_region
      _
    $region9: #{bert_forward.1} parent=1 // pred_fallthru
      _
    // Predicated region
    $region10: #{bert_forward.1} parent=1 // pred_check
      _
    $region11: #{bert_forward.1} parent=1 // pred_check_branch
      %36 = sbr.rel (0) target = $region13
    $region12: #{bert_forward.1} parent=1 // pred_region
      _
    $region13: #{bert_forward.1} parent=1 // pred_fallthru
      _
    // Predicated region
    $region14: #{bert_forward.1} parent=1 // pred_check
      _
    $region15: #{bert_forward.1} parent=1 // pred_check_branch
      %38 = sbr.rel (0) target = $region17
    $region16: #{bert_forward.1} parent=1 // pred_region
      _
    $region17: #{bert_forward.1} parent=1 // pred_fallthru
      _
    // Predicated region
    $region18: #{bert_forward.1} parent=1 // pred_check
      _
    $region19: #{bert_forward.1} parent=1 // pred_check_branch
      %40 = sbr.rel (0) target = $region21
    $region20: #{bert_forward.1} parent=1 // pred_region
      _
    $region21: #{bert_forward.1} parent=1 // pred_fallthru
      _
    // Predicated region
    $region22: #{bert_forward.1} parent=1 // pred_check
      _
    $region23: #{bert_forward.1} parent=1 // pred_check_branch
      %42 = sbr.rel (0) target = $region25
    $region24: #{bert_forward.1} parent=1 // pred_region
      _
    $region25: #{bert_forward.1} parent=1 // pred_fallthru
      _
    // Predicated region
    $region26: #{bert_forward.1} parent=1 // pred_check
      _
    $region27: #{bert_forward.1} parent=1 // pred_check_branch
      %44 = sbr.rel (0) target = $region29
    $region28: #{bert_forward.1} parent=1 // pred_region
      _
    $region29: #{bert_forward.1} parent=1 // pred_fallthru
      _
    // Predicated region
    $region30: #{bert_forward.1} parent=1 // pred_check
      _
    $region31: #{bert_forward.1} parent=1 // pred_check_branch
      %46 = sbr.rel (0) target = $region33
    $region32: #{bert_forward.1} parent=1 // pred_region
      _
    $region33: #{bert_forward.1} parent=1 // pred_fallthru
      _
    // Predicated region
    $region34: #{bert_forward.1} parent=1 // pred_check
      _
    $region35: #{bert_forward.1} parent=1 // pred_check_branch
      %48 = sbr.rel (0) target = $region37
    $region36: #{bert_forward.1} parent=1 // pred_region
      _
    $region37: #{bert_forward.1} parent=1 // pred_fallthru
      _
    // Predicated region
    $region38: #{bert_forward.1} parent=1 // pred_check
      _
    $region39: #{bert_forward.1} parent=1 // pred_check_branch
      %50 = sbr.rel (0) target = $region41
    $region40: #{bert_forward.1} parent=1 // pred_region
      _
    $region41: #{bert_forward.1} parent=1 // pred_fallthru
      _
    // Predicated region
    $region42: #{bert_forward.1} parent=1 // pred_check
      _
    $region43: #{bert_forward.1} parent=1 // pred_check_branch
      %52 = sbr.rel (0) target = $region45
    $region44: #{bert_forward.1} parent=1 // pred_region
      _
    $region45: #{bert_forward.1} parent=1 // pred_fallthru
      _
    // Predicated region
    $region46: #{bert_forward.1} parent=1 // pred_check
      _
    $region47: #{bert_forward.1} parent=1 // pred_check_branch
      %54 = sbr.rel (0) target = $region49
    $region48: #{bert_forward.1} parent=1 // pred_region
      _
    $region49: #{bert_forward.1} parent=1 // pred_fallthru
      _
    // Predicated region
    $region50: #{bert_forward.1} parent=1 // pred_check
      _
    $region51: #{bert_forward.1} parent=1 // pred_check_branch
      %56 = sbr.rel (0) target = $region53
    $region52: #{bert_forward.1} parent=1 // pred_region
      _
    $region53: #{bert_forward.1} parent=1 // pred_fallthru
      _
    // Predicated region
    $region54: #{bert_forward.1} parent=1 // pred_check
      _
    $region55: #{bert_forward.1} parent=1 // pred_check_branch
      %58 = sbr.rel (0) target = $region57
    $region56: #{bert_forward.1} parent=1 // pred_region
      _
    $region57: #{bert_forward.1} parent=1 // pred_fallthru
      _
    // Predicated region
    $region58: #{bert_forward.1} parent=1 // pred_check
      _
    $region59: #{bert_forward.1} parent=1 // pred_check_branch
      %60 = sbr.rel (0) target = $region61
    $region60: #{bert_forward.1} parent=1 // pred_region
      _
    $region61: #{bert_forward.1} parent=1 // pred_fallthru
      _
    // Predicated region
    $region62: #{bert_forward.1} parent=1 // pred_check
      _
    $region63: #{bert_forward.1} parent=1 // pred_check_branch
      %62 = sbr.rel (0) target = $region65
    $region64: #{bert_forward.1} parent=1 // pred_region
      _
    $region65: #{bert_forward.1} parent=1 // pred_fallthru
      _
    // Predicated region
    $region66: #{bert_forward.1} parent=1 // pred_check
      _
    $region67: #{bert_forward.1} parent=1 // pred_check_branch
      %64 = sbr.rel (0) target = $region69
    $region68: #{bert_forward.1} parent=1 // pred_region
      _
    $region69: #{bert_forward.1} parent=1 // pred_fallthru
      _
    // Predicated region
    $region70: #{bert_forward.1} parent=1 // pred_check
      _
    $region71: #{bert_forward.1} parent=1 // pred_check_branch
      %66 = sbr.rel (0) target = $region73
    $region72: #{bert_forward.1} parent=1 // pred_region
      _
    $region73: #{bert_forward.1} parent=1 // pred_fallthru
      _
    // Predicated region
    $region74: #{bert_forward.1} parent=1 // pred_check
      _
    $region75: #{bert_forward.1} parent=1 // pred_check_branch
      %68 = sbr.rel (0) target = $region77
    $region76: #{bert_forward.1} parent=1 // pred_region
      _
    $region77: #{bert_forward.1} parent=1 // pred_fallthru
      _
    // Predicated region
    $region78: #{bert_forward.1} parent=1 // pred_check
      _
    $region79: #{bert_forward.1} parent=1 // pred_check_branch
      %70 = sbr.rel (0) target = $region81
    $region80: #{bert_forward.1} parent=1 // pred_region
      _
    $region81: #{bert_forward.1} parent=1 // pred_fallthru
      _
    // Predicated region
    $region82: #{bert_forward.1} parent=1 // pred_check
      _
    $region83: #{bert_forward.1} parent=1 // pred_check_branch
      %72 = sbr.rel (0) target = $region85
    $region84: #{bert_forward.1} parent=1 // pred_region
      _
    $region85: #{bert_forward.1} parent=1 // pred_fallthru
      _
    // Predicated region
    $region86: #{bert_forward.1} parent=1 // pred_check
      _
    $region87: #{bert_forward.1} parent=1 // pred_check_branch
      %74 = sbr.rel (0) target = $region89
    $region88: #{bert_forward.1} parent=1 // pred_region
      _
    $region89: #{bert_forward.1} parent=1 // pred_fallthru
      _
    %v76 = vld [vmem:[%s0] sm:$0xff]
    %v77 = vld [vmem:[%s0 + $0x8] sm:$0xff]
    %v78 = vld [vmem:[%s1] sm:$0xff]
    %v79 = vld [vmem:[%s1 + $0x8] sm:$0xff]
    %v80 = vlaneseq
    %v81 = vand.u32 %v80, 127
    %82 = vset.pattern.permute.xlu0 0
    %83 = vperm.xlu0 %82, %v76
    %v84 = vpop.permute.xlu0 %83
    %85 = vset.pattern.permute.xlu0 0
    %86 = vperm.xlu0 %85, %v77
    %v87 = vpop.permute.xlu0 %86
    %vm88 = vcmp.eq.s32.totalorder %v81, %v84
    %vm89 = vcmp.eq.s32.totalorder %v81, %v87
    %v90 = vsel %vm88, 1, 0
    %v91 = vsel %vm89, 1, 0
    %v92 = vcvt.s32.f32 %v90
    %v93 = vcvt.s32.f32 %v91
    %94 = vset.pattern.permute.xlu0 0
    %95 = vperm.xlu0 %94, %v78
    %v96 = vpop.permute.xlu0 %95
    %97 = vset.pattern.permute.xlu0 0
    %98 = vperm.xlu0 %97, %v79
    %v99 = vpop.permute.xlu0 %98
    %vm100 = vcmp.eq.s32.totalorder %v81, %v96
    %vm101 = vcmp.eq.s32.totalorder %v81, %v99
    %v102 = vsel %vm100, 1, 0
    %v103 = vsel %vm101, 1, 0
    %v104 = vcvt.s32.f32 %v102
    %v105 = vcvt.s32.f32 %v103
    %v106 = vld [vmem:[%s3] sm:$0xff]
    %v107 = vld [vmem:[%s3 + $0x8] sm:$0xff]
    %v108 = vld [vmem:[%s3 + $0x10] sm:$0xff]
    %v109 = vld [vmem:[%s3 + $0x18] sm:$0xff]
    %v110 = vld [vmem:[%s3 + $0x20] sm:$0xff]
    %v111 = vld [vmem:[%s3 + $0x28] sm:$0xff]
    %v112 = vld [vmem:[%s3 + $0x30] sm:$0xff]
    %v113 = vld [vmem:[%s3 + $0x38] sm:$0xff]
    %v114 = vld [vmem:[%s3 + $0x40] sm:$0xff]
    %v115 = vld [vmem:[%s3 + $0x48] sm:$0xff]
    %v116 = vld [vmem:[%s3 + $0x50] sm:$0xff]
    %v117 = vld [vmem:[%s3 + $0x58] sm:$0xff]
    %v118 = vld [vmem:[%s3 + $0x60] sm:$0xf]
    %v119 = vld [vmem:[%s5] sm:$0x3]
    %vm120 = vcmask 15360
    %v122 = vsel %vm120, %v104, 0
    %v125 = vsel %vm120, %v105, 0
    %vm127 = vcmask 1041408
    %v129 = vsel %vm127, %v119, 0
    %131 = vmatprep.subr.mxu0 0.0
    %132 = vmatpush1.msra.mxu0 %v129
    %133 = vmatprep.subr.mxu0 0.0
    %134 = vmatpush1.msra.mxu0 0.0
    %135 = vmatprep.subr.mxu0 0.0
    %136 = vmatpush1.msra.mxu0 0.0
    %137 = vmatprep.subr.mxu0 0.0
    %138 = vmatpush1.msra.mxu0 0.0
    %139 = vmatprep.subr.mxu0 0.0
    %140 = vmatpush1.msra.mxu0 0.0
    %141 = vmatprep.subr.mxu0 0.0
    %142 = vmatpush1.msra.mxu0 0.0
    %143 = vmatprep.subr.mxu0 0.0
    %144 = vmatpush1.msra.mxu0 0.0
    %145 = vmatprep.subr.mxu0 0.0
    %146 = vmatpush1.msra.mxu0 0.0
    %147 = vmatprep.subr.mxu0 0.0
    %148 = vmatpush1.msra.mxu0 0.0
    %149 = vmatprep.subr.mxu0 0.0
    %150 = vmatpush1.msra.mxu0 0.0
    %151 = vmatprep.subr.mxu0 0.0
    %152 = vmatpush1.msra.mxu0 0.0
    %153 = vmatprep.subr.mxu0 0.0
    %154 = vmatpush1.msra.mxu0 0.0
    %155 = vmatprep.subr.mxu0 0.0
    %156 = vmatpush1.msra.mxu0 0.0
    %157 = vmatprep.subr.mxu0 0.0
    %158 = vmatpush1.msra.mxu0 0.0
    %159 = vmatprep.subr.mxu0 0.0
    %160 = vmatpush1.msra.mxu0 0.0
    %161 = vmatprep.subr.mxu0 0.0
    %162 = vmatpush1.msra.mxu0 0.0
    %163 = vmatprep.subr.mxu0 0.0
    %164 = vmatpush1.msra.mxu0 0.0
    %165 = vmatprep.subr.mxu0 0.0
    %166 = vmatpush1.msra.mxu0 0.0
    %167 = vmatprep.subr.mxu0 0.0
    %168 = vmatpush1.msra.mxu0 0.0
    %169 = vmatprep.subr.mxu0 0.0
    %170 = vmatpush1.msra.mxu0 0.0
    %171 = vmatprep.subr.mxu0 0.0
    %172 = vmatpush1.msra.mxu0 0.0
    %173 = vmatprep.subr.mxu0 0.0
    %174 = vmatpush1.msra.mxu0 0.0
    %175 = vmatprep.subr.mxu0 0.0
    %176 = vmatpush1.msra.mxu0 0.0
    %177 = vmatprep.subr.mxu0 0.0
    %178 = vmatpush1.msra.mxu0 0.0
    %179 = vmatprep.subr.mxu0 0.0
    %180 = vmatpush1.msra.mxu0 0.0
    %181 = vmatprep.subr.mxu0 0.0
    %182 = vmatpush1.msra.mxu0 0.0
    %183 = vmatprep.subr.mxu0 0.0
    %184 = vmatpush1.msra.mxu0 0.0
    %185 = vmatprep.subr.mxu0 0.0
    %186 = vmatpush1.msra.mxu0 0.0
    %187 = vmatprep.subr.mxu0 0.0
    %188 = vmatpush1.msra.mxu0 0.0
    %189 = vmatprep.subr.mxu0 0.0
    %190 = vmatpush1.msra.mxu0 0.0
    %191 = vmatprep.subr.mxu0 0.0
    %192 = vmatpush1.msra.mxu0 0.0
    %193 = vmatprep.subr.mxu0 0.0
    %194 = vmatpush1.msra.mxu0 0.0
    %195 = vmatprep.mubr.f32.mxu0 0.0
    %196 = vmatmul.mubr.f32.gmra.mrb[0].mxu0 %v122
    %v197 = vpop.f32.mrb[0].mxu0
    %v198 = vadd.f32 0.0, %v197
    %v199 = vpop.f32.mrb[0].mxu0
    %200 = vmatprep.mubr.f32.mxu0 0.0
    %201 = vmatmul.mubr.f32.gmra.mrb[0].mxu0 %v125
    %v202 = vpop.f32.mrb[0].mxu0
    %v203 = vadd.f32 0.0, %v202
    %v204 = vpop.f32.mrb[0].mxu0
    %205 = vdwg.mxu0
    %v206 = vld [vmem:[%s4] sm:$0xff]
    %vm207 = vcmask 818176
    %v209 = vsel %vm207, %v92, 0
    %v212 = vsel %vm207, %v93, 0
    %vm214 = vcmask 1043456
    %v216 = vsel %vm214, %v118, 0
    %218 = vmatprep.subr.mxu0 0.0
    %219 = vmatpush1.msra.mxu0 %v106
    %220 = vmatprep.subr.mxu0 0.0
    %221 = vmatpush1.msra.mxu0 %v107
    %222 = vmatprep.subr.mxu0 0.0
    %223 = vmatpush1.msra.mxu0 %v108
    %224 = vmatprep.subr.mxu0 0.0
    %225 = vmatpush1.msra.mxu0 %v109
    %226 = vmatprep.subr.mxu0 0.0
    %227 = vmatpush1.msra.mxu0 %v110
    %228 = vmatprep.subr.mxu0 0.0
    %229 = vmatpush1.msra.mxu0 %v111
    %230 = vmatprep.subr.mxu0 0.0
    %231 = vmatpush1.msra.mxu0 %v112
    %232 = vmatprep.subr.mxu0 0.0
    %233 = vmatpush1.msra.mxu0 %v113
    %234 = vmatprep.subr.mxu0 0.0
    %235 = vmatpush1.msra.mxu0 %v114
    %236 = vmatprep.subr.mxu0 0.0
    %237 = vmatpush1.msra.mxu0 %v115
    %238 = vmatprep.subr.mxu0 0.0
    %239 = vmatpush1.msra.mxu0 %v116
    %240 = vmatprep.subr.mxu0 0.0
    %241 = vmatpush1.msra.mxu0 %v117
    %242 = vmatprep.subr.mxu0 0.0
    %243 = vmatpush1.msra.mxu0 %v216
    %244 = vmatprep.subr.mxu0 0.0
    %245 = vmatpush1.msra.mxu0 0.0
    %246 = vmatprep.subr.mxu0 0.0
    %247 = vmatpush1.msra.mxu0 0.0
    %248 = vmatprep.subr.mxu0 0.0
    %249 = vmatpush1.msra.mxu0 0.0
    %250 = vmatprep.subr.mxu0 0.0
    %251 = vmatpush1.msra.mxu0 0.0
    %252 = vmatprep.subr.mxu0 0.0
    %253 = vmatpush1.msra.mxu0 0.0
    %254 = vmatprep.subr.mxu0 0.0
    %255 = vmatpush1.msra.mxu0 0.0
    %256 = vmatprep.subr.mxu0 0.0
    %257 = vmatpush1.msra.mxu0 0.0
    %258 = vmatprep.subr.mxu0 0.0
    %259 = vmatpush1.msra.mxu0 0.0
    %260 = vmatprep.subr.mxu0 0.0
    %261 = vmatpush1.msra.mxu0 0.0
    %262 = vmatprep.subr.mxu0 0.0
    %263 = vmatpush1.msra.mxu0 0.0
    %264 = vmatprep.subr.mxu0 0.0
    %265 = vmatpush1.msra.mxu0 0.0
    %266 = vmatprep.subr.mxu0 0.0
    %267 = vmatpush1.msra.mxu0 0.0
    %268 = vmatprep.subr.mxu0 0.0
    %269 = vmatpush1.msra.mxu0 0.0
    %270 = vmatprep.subr.mxu0 0.0
    %271 = vmatpush1.msra.mxu0 0.0
    %272 = vmatprep.subr.mxu0 0.0
    %273 = vmatpush1.msra.mxu0 0.0
    %274 = vmatprep.subr.mxu0 0.0
    %275 = vmatpush1.msra.mxu0 0.0
    %276 = vmatprep.subr.mxu0 0.0
    %277 = vmatpush1.msra.mxu0 0.0
    %278 = vmatprep.subr.mxu0 0.0
    %279 = vmatpush1.msra.mxu0 0.0
    %280 = vmatprep.subr.mxu0 0.0
    %281 = vmatpush1.msra.mxu0 0.0
    %282 = vmatprep.mubr.f32.mxu0 0.0
    %283 = vmatmul.mubr.f32.gmra.mrb[0].mxu0 %v209
    %v284 = vpop.f32.mrb[0].mxu0
    %v285 = vadd.f32 %v206, %v284
    %v286 = vpop.f32.mrb[0].mxu0
    %287 = vmatprep.mubr.f32.mxu0 0.0
    %288 = vmatmul.mubr.f32.gmra.mrb[0].mxu0 %v212
    %v289 = vpop.f32.mrb[0].mxu0
    %v290 = vadd.f32 %v206, %v289
    %v291 = vpop.f32.mrb[0].mxu0
    %292 = vdwg.mxu0
    %v293 = vadd.f32 %v285, %v198
    %v294 = vadd.f32 %v290, %v203
    %v295 = vld [vmem:[%s6] sm:$0x1]
    %v296 = vld [vmem:[%s7] sm:$0x1]
    %vm297 = vcmask 261120
    %v298 = vsel %vm297, %v293, 0.0
    %299 = vadd.xlane.f32.xlu0 %v298
    %v300 = vpop.xlane.xlu0 %299
    %v301 = vsel %vm297, %v294, 0.0
    %302 = vadd.xlane.f32.xlu0 %v301
    %v303 = vpop.xlane.xlu0 %302
    %v304 = vrcp.pop 32.0
    %v305 = vmul.f32 %v300, %v304
    %v306 = vmul.f32 %v303, %v304
    %v307 = vsub.f32 %v293, %v305
    %v308 = vsub.f32 %v294, %v306
    %v309 = vmul.f32 %v307, %v307
    %v310 = vmul.f32 %v308, %v308
    %v311 = vsel %vm297, %v309, 0.0
    %312 = vadd.xlane.f32.xlu0 %v311
    %v313 = vpop.xlane.xlu0 %312
    %v314 = vsel %vm297, %v310, 0.0
    %315 = vadd.xlane.f32.xlu0 %v314
    %v316 = vpop.xlane.xlu0 %315
    %v317 = vmul.f32 %v313, %v304
    %v318 = vmul.f32 %v316, %v304
    %v319 = vadd.f32 %v317, 1e-12
    %v320 = vadd.f32 %v318, 1e-12
    %v321 = vrsqrt.pop %v319
    %v322 = vrsqrt.pop %v320
    %v323 = vmul.f32 %v307, %v321
    %v324 = vmul.f32 %v308, %v322
    %v326 = vlaneseq
    %v327 = vshrl.u32 %v326, 7
    %v328 = vsub.s32 0, %v327
    %v329 = vrot.slane %v295, %v328
    %v331 = vmul.f32 %v323, %v329
    %v332 = vmul.f32 %v324, %v329
    %v334 = vlaneseq
    %v335 = vshrl.u32 %v334, 7
    %v336 = vsub.s32 0, %v335
    %v337 = vrot.slane %v296, %v336
    %v339 = vadd.f32 %v331, %v337
    %v340 = vadd.f32 %v332, %v337
    %v341 = vld [vmem:[%s2] sm:$0x3]
    %v342 = vcvt.s32.f32 %v341
    %v343 = vsub.f32 1.0, %v342
    %v344 = vmul.f32 %v343, -1e+09
    %v346 = vrot.slane %v344, 1
    %v348 = vld [vmem:[%s8] sm:$0xf]
    %v349 = vld [vmem:[%s8 + $0x4] sm:$0xf]
    %v350 = vld [vmem:[%s8 + $0x8] sm:$0xf]
    %v351 = vld [vmem:[%s8 + $0xc] sm:$0xf]
    %v352 = vpack.c.bf16 %v340, %v339
    %v353 = vld [vmem:[%s9] sm:$0x1]
    %v355 = vlaneseq
    %v356 = vshrl.u32 %v355, 7
    %v357 = vsub.s32 0, %v356
    %v358 = vrot.slane %v353, %v357
    %v364 = vunpack.c.l.b16 %v348
    %v365 = vunpack.c.l.b16 %v349
    %v366 = vunpack.c.l.b16 %v350
    %v367 = vunpack.c.l.b16 %v351
    %v368 = vpack.c.b16 %v365, %v364
    %v369 = vpack.c.b16 %v367, %v366
    %v373 = vsel %vm297, %v352, 0
    %375 = vmatprep.subr.bf16.mxu0 0
    %376 = vmatpush1.bf16.msra.mxu0 %v368
    %377 = vmatprep.subr.bf16.mxu0 0
    %378 = vmatpush1.bf16.msra.mxu0 %v369
    %379 = vmatprep.subr.bf16.mxu0 0
    %380 = vmatpush1.bf16.msra.mxu0 0
    %381 = vmatprep.subr.bf16.mxu0 0
    %382 = vmatpush1.bf16.msra.mxu0 0
    %383 = vmatprep.subr.bf16.mxu0 0
    %384 = vmatpush1.bf16.msra.mxu0 0
    %385 = vmatprep.subr.bf16.mxu0 0
    %386 = vmatpush1.bf16.msra.mxu0 0
    %387 = vmatprep.subr.bf16.mxu0 0
    %388 = vmatpush1.bf16.msra.mxu0 0
    %389 = vmatprep.subr.bf16.mxu0 0
    %390 = vmatpush1.bf16.msra.mxu0 0
    %391 = vmatprep.subr.bf16.mxu0 0
    %392 = vmatpush1.bf16.msra.mxu0 0
    %393 = vmatprep.subr.bf16.mxu0 0
    %394 = vmatpush1.bf16.msra.mxu0 0
    %395 = vmatprep.subr.bf16.mxu0 0
    %396 = vmatpush1.bf16.msra.mxu0 0
    %397 = vmatprep.subr.bf16.mxu0 0
    %398 = vmatpush1.bf16.msra.mxu0 0
    %399 = vmatprep.subr.bf16.mxu0 0
    %400 = vmatpush1.bf16.msra.mxu0 0
    %401 = vmatprep.subr.bf16.mxu0 0
    %402 = vmatpush1.bf16.msra.mxu0 0
    %403 = vmatprep.subr.bf16.mxu0 0
    %404 = vmatpush1.bf16.msra.mxu0 0
    %405 = vmatprep.subr.bf16.mxu0 0
    %406 = vmatpush1.bf16.msra.mxu0 0
    %407 = vmatprep.mubr.bf16.mxu0 0
    %408 = vmatmul.mubr.bf16.gmra.mrb[0].mxu0 %v373
    %v409 = vpop.f32.mrb[0].mxu0
    %v410 = vadd.f32 %v358, %v409
    %v411 = vpop.f32.mrb[0].mxu0
    %v412 = vpop.f32.mrb[0].mxu0
    %v413 = vadd.f32 %v358, %v412
    %v414 = vpop.f32.mrb[0].mxu0
    %415 = vdwg.mxu0
    %417 = vrot.lane.b32.xlu0 %v410, 112
    %v418 = vpop.permute.xlu0 %417
    %421 = vrot.lane.b32.xlu0 %v413, 112
    %v422 = vpop.permute.xlu0 %421
    %v424 = vpack.c.bf16 %v410, %v410
    %v425 = vpack.c.bf16 %v418, %v418
    %v426 = vpack.c.bf16 %v413, %v413
    %v427 = vpack.c.bf16 %v422, %v422
    %429 = vrot.lane.b32.xlu0 %v424, 96
    %v430 = vpop.permute.xlu0 %429
    %vm431 = vcmask 130048
    %v433 = vsel %vm431, %v424, 0
    %v436 = vsel %vm431, %v430, 0
    %438 = vmatprep.subr.bf16.mxu0 0
    %439 = vmatpush1.bf16.xpose.msra.mxu0 %v436
    %440 = vmatprep.subr.bf16.mxu0 0
    %441 = vmatpush1.bf16.xpose.msra.mxu0 0
    %442 = vmatprep.subr.bf16.mxu0 0
    %443 = vmatpush1.bf16.xpose.msra.mxu0 0
    %444 = vmatprep.subr.bf16.mxu0 0
    %445 = vmatpush1.bf16.xpose.msra.mxu0 0
    %446 = vmatprep.subr.bf16.mxu0 0
    %447 = vmatpush1.bf16.xpose.msra.mxu0 0
    %448 = vmatprep.subr.bf16.mxu0 0
    %449 = vmatpush1.bf16.xpose.msra.mxu0 0
    %450 = vmatprep.subr.bf16.mxu0 0
    %451 = vmatpush1.bf16.xpose.msra.mxu0 0
    %452 = vmatprep.subr.bf16.mxu0 0
    %453 = vmatpush1.bf16.xpose.msra.mxu0 0
    %454 = vmatprep.subr.bf16.mxu0 0
    %455 = vmatpush1.bf16.xpose.msra.mxu0 0
    %456 = vmatprep.subr.bf16.mxu0 0
    %457 = vmatpush1.bf16.xpose.msra.mxu0 0
    %458 = vmatprep.subr.bf16.mxu0 0
    %459 = vmatpush1.bf16.xpose.msra.mxu0 0
    %460 = vmatprep.subr.bf16.mxu0 0
    %461 = vmatpush1.bf16.xpose.msra.mxu0 0
    %462 = vmatprep.subr.bf16.mxu0 0
    %463 = vmatpush1.bf16.xpose.msra.mxu0 0
    %464 = vmatprep.subr.bf16.mxu0 0
    %465 = vmatpush1.bf16.xpose.msra.mxu0 0
    %466 = vmatprep.subr.bf16.mxu0 0
    %467 = vmatpush1.bf16.xpose.msra.mxu0 0
    %468 = vmatprep.subr.bf16.mxu0 0
    %469 = vmatpush1.bf16.xpose.msra.mxu0 0
    %470 = vmatprep.mubr.bf16.mxu0 0
    %471 = vmatmul.mubr.bf16.gmra.mrb[0].mxu0 %v433
    %v472 = vpop.f32.mrb[0].mxu0
    %v473 = vadd.f32 0.0, %v472
    %v474 = vpop.f32.mrb[0].mxu0
    %v475 = vpop.f32.mrb[0].mxu0
    %v476 = vpop.f32.mrb[0].mxu0
    %477 = vdwg.mxu0
    %479 = vrot.lane.b32.xlu0 %v425, 96
    %v480 = vpop.permute.xlu0 %479
    %v482 = vsel %vm431, %v425, 0
    %v485 = vsel %vm431, %v480, 0
    %487 = vmatprep.subr.bf16.mxu0 0
    %488 = vmatpush1.bf16.xpose.msra.mxu0 %v485
    %489 = vmatprep.subr.bf16.mxu0 0
    %490 = vmatpush1.bf16.xpose.msra.mxu0 0
    %491 = vmatprep.subr.bf16.mxu0 0
    %492 = vmatpush1.bf16.xpose.msra.mxu0 0
    %493 = vmatprep.subr.bf16.mxu0 0
    %494 = vmatpush1.bf16.xpose.msra.mxu0 0
    %495 = vmatprep.subr.bf16.mxu0 0
    %496 = vmatpush1.bf16.xpose.msra.mxu0 0
    %497 = vmatprep.subr.bf16.mxu0 0
    %498 = vmatpush1.bf16.xpose.msra.mxu0 0
    %499 = vmatprep.subr.bf16.mxu0 0
    %500 = vmatpush1.bf16.xpose.msra.mxu0 0
    %501 = vmatprep.subr.bf16.mxu0 0
    %502 = vmatpush1.bf16.xpose.msra.mxu0 0
    %503 = vmatprep.subr.bf16.mxu0 0
    %504 = vmatpush1.bf16.xpose.msra.mxu0 0
    %505 = vmatprep.subr.bf16.mxu0 0
    %506 = vmatpush1.bf16.xpose.msra.mxu0 0
    %507 = vmatprep.subr.bf16.mxu0 0
    %508 = vmatpush1.bf16.xpose.msra.mxu0 0
    %509 = vmatprep.subr.bf16.mxu0 0
    %510 = vmatpush1.bf16.xpose.msra.mxu0 0
    %511 = vmatprep.subr.bf16.mxu0 0
    %512 = vmatpush1.bf16.xpose.msra.mxu0 0
    %513 = vmatprep.subr.bf16.mxu0 0
    %514 = vmatpush1.bf16.xpose.msra.mxu0 0
    %515 = vmatprep.subr.bf16.mxu0 0
    %516 = vmatpush1.bf16.xpose.msra.mxu0 0
    %517 = vmatprep.subr.bf16.mxu0 0
    %518 = vmatpush1.bf16.xpose.msra.mxu0 0
    %519 = vmatprep.mubr.bf16.mxu0 0
    %520 = vmatmul.mubr.bf16.gmra.mrb[0].mxu0 %v482
    %v521 = vpop.f32.mrb[0].mxu0
    %v522 = vadd.f32 0.0, %v521
    %v523 = vpop.f32.mrb[0].mxu0
    %v524 = vpop.f32.mrb[0].mxu0
    %v525 = vpop.f32.mrb[0].mxu0
    %526 = vdwg.mxu0
    %528 = vrot.lane.b32.xlu0 %v426, 96
    %v529 = vpop.permute.xlu0 %528
    %v531 = vsel %vm431, %v426, 0
    %v534 = vsel %vm431, %v529, 0
    %536 = vmatprep.subr.bf16.mxu0 0
    %537 = vmatpush1.bf16.xpose.msra.mxu0 %v534
    %538 = vmatprep.subr.bf16.mxu0 0
    %539 = vmatpush1.bf16.xpose.msra.mxu0 0
    %540 = vmatprep.subr.bf16.mxu0 0
    %541 = vmatpush1.bf16.xpose.msra.mxu0 0
    %542 = vmatprep.subr.bf16.mxu0 0
    %543 = vmatpush1.bf16.xpose.msra.mxu0 0
    %544 = vmatprep.subr.bf16.mxu0 0
    %545 = vmatpush1.bf16.xpose.msra.mxu0 0
    %546 = vmatprep.subr.bf16.mxu0 0
    %547 = vmatpush1.bf16.xpose.msra.mxu0 0
    %548 = vmatprep.subr.bf16.mxu0 0
    %549 = vmatpush1.bf16.xpose.msra.mxu0 0
    %550 = vmatprep.subr.bf16.mxu0 0
    %551 = vmatpush1.bf16.xpose.msra.mxu0 0
    %552 = vmatprep.subr.bf16.mxu0 0
    %553 = vmatpush1.bf16.xpose.msra.mxu0 0
    %554 = vmatprep.subr.bf16.mxu0 0
    %555 = vmatpush1.bf16.xpose.msra.mxu0 0
    %556 = vmatprep.subr.bf16.mxu0 0
    %557 = vmatpush1.bf16.xpose.msra.mxu0 0
    %558 = vmatprep.subr.bf16.mxu0 0
    %559 = vmatpush1.bf16.xpose.msra.mxu0 0
    %560 = vmatprep.subr.bf16.mxu0 0
    %561 = vmatpush1.bf16.xpose.msra.mxu0 0
    %562 = vmatprep.subr.bf16.mxu0 0
    %563 = vmatpush1.bf16.xpose.msra.mxu0 0
    %564 = vmatprep.subr.bf16.mxu0 0
    %565 = vmatpush1.bf16.xpose.msra.mxu0 0
    %566 = vmatprep.subr.bf16.mxu0 0
    %567 = vmatpush1.bf16.xpose.msra.mxu0 0
    %568 = vmatprep.mubr.bf16.mxu0 0
    %569 = vmatmul.mubr.bf16.gmra.mrb[0].mxu0 %v531
    %v570 = vpop.f32.mrb[0].mxu0
    %v571 = vadd.f32 0.0, %v570
    %v572 = vpop.f32.mrb[0].mxu0
    %v573 = vpop.f32.mrb[0].mxu0
    %v574 = vpop.f32.mrb[0].mxu0
    %575 = vdwg.mxu0
    %577 = vrot.lane.b32.xlu0 %v427, 96
    %v578 = vpop.permute.xlu0 %577
    %v580 = vsel %vm431, %v427, 0
    %v583 = vsel %vm431, %v578, 0
    %585 = vmatprep.subr.bf16.mxu0 0
    %586 = vmatpush1.bf16.xpose.msra.mxu0 %v583
    %587 = vmatprep.subr.bf16.mxu0 0
    %588 = vmatpush1.bf16.xpose.msra.mxu0 0
    %589 = vmatprep.subr.bf16.mxu0 0
    %590 = vmatpush1.bf16.xpose.msra.mxu0 0
    %591 = vmatprep.subr.bf16.mxu0 0
    %592 = vmatpush1.bf16.xpose.msra.mxu0 0
    %593 = vmatprep.subr.bf16.mxu0 0
    %594 = vmatpush1.bf16.xpose.msra.mxu0 0
    %595 = vmatprep.subr.bf16.mxu0 0
    %596 = vmatpush1.bf16.xpose.msra.mxu0 0
    %597 = vmatprep.subr.bf16.mxu0 0
    %598 = vmatpush1.bf16.xpose.msra.mxu0 0
    %599 = vmatprep.subr.bf16.mxu0 0
    %600 = vmatpush1.bf16.xpose.msra.mxu0 0
    %601 = vmatprep.subr.bf16.mxu0 0
    %602 = vmatpush1.bf16.xpose.msra.mxu0 0
    %603 = vmatprep.subr.bf16.mxu0 0
    %604 = vmatpush1.bf16.xpose.msra.mxu0 0
    %605 = vmatprep.subr.bf16.mxu0 0
    %606 = vmatpush1.bf16.xpose.msra.mxu0 0
    %607 = vmatprep.subr.bf16.mxu0 0
    %608 = vmatpush1.bf16.xpose.msra.mxu0 0
    %609 = vmatprep.subr.bf16.mxu0 0
    %610 = vmatpush1.bf16.xpose.msra.mxu0 0
    %611 = vmatprep.subr.bf16.mxu0 0
    %612 = vmatpush1.bf16.xpose.msra.mxu0 0
    %613 = vmatprep.subr.bf16.mxu0 0
    %614 = vmatpush1.bf16.xpose.msra.mxu0 0
    %615 = vmatprep.subr.bf16.mxu0 0
    %616 = vmatpush1.bf16.xpose.msra.mxu0 0
    %617 = vmatprep.mubr.bf16.mxu0 0
    %618 = vmatmul.mubr.bf16.gmra.mrb[0].mxu0 %v580
    %v619 = vpop.f32.mrb[0].mxu0
    %v620 = vadd.f32 0.0, %v619
    %v621 = vpop.f32.mrb[0].mxu0
    %v622 = vpop.f32.mrb[0].mxu0
    %v623 = vpop.f32.mrb[0].mxu0
    %624 = vdwg.mxu0
    %v625 = vmul.f32 %v473, 0.25
    %v626 = vmul.f32 %v522, 0.25
    %v627 = vmul.f32 %v571, 0.25
    %v628 = vmul.f32 %v620, 0.25
    %v629 = vlaneseq
    %v630 = vshrl.u32 %v629, 7
    %v631 = vsub.s32 0, %v630
    %v632 = vrot.slane %v344, %v631
    %v633 = vlaneseq
    %v634 = vshrl.u32 %v633, 7
    %v635 = vsub.s32 0, %v634
    %v636 = vrot.slane %v346, %v635
    %v637 = vadd.f32 %v625, %v632
    %v638 = vadd.f32 %v626, %v632
    %v639 = vadd.f32 %v627, %v636
    %v640 = vadd.f32 %v628, %v636
    %vm641 = vcmask 64512
    %v642 = vsel %vm641, %v637, -inf
    %643 = vmax.xlane.f32.xlu0 %v642
    %v644 = vpop.xlane.xlu0 %643
    %v645 = vsel %vm641, %v638, -inf
    %646 = vmax.xlane.f32.xlu0 %v645
    %v647 = vpop.xlane.xlu0 %646
    %v648 = vsel %vm641, %v639, -inf
    %649 = vmax.xlane.f32.xlu0 %v648
    %v650 = vpop.xlane.xlu0 %649
    %v651 = vsel %vm641, %v640, -inf
    %652 = vmax.xlane.f32.xlu0 %v651
    %v653 = vpop.xlane.xlu0 %652
    %v654 = vsub.f32 %v637, %v644
    %v655 = vsub.f32 %v638, %v647
    %v656 = vsub.f32 %v639, %v650
    %v657 = vsub.f32 %v640, %v653
    %v658 = vmul.f32 %v654, 1.442695
    %v659 = vpow.pop %v658
    %v660 = vmul.f32 %v655, 1.442695
    %v661 = vpow.pop %v660
    %v662 = vmul.f32 %v656, 1.442695
    %v663 = vpow.pop %v662
    %v664 = vmul.f32 %v657, 1.442695
    %v665 = vpow.pop %v664
    %v666 = vsel %vm641, %v659, 0.0
    %667 = vadd.xlane.f32.xlu0 %v666
    %v668 = vpop.xlane.xlu0 %667
    %v669 = vsel %vm641, %v661, 0.0
    %670 = vadd.xlane.f32.xlu0 %v669
    %v671 = vpop.xlane.xlu0 %670
    %v672 = vsel %vm641, %v663, 0.0
    %673 = vadd.xlane.f32.xlu0 %v672
    %v674 = vpop.xlane.xlu0 %673
    %v675 = vsel %vm641, %v665, 0.0
    %676 = vadd.xlane.f32.xlu0 %v675
    %v677 = vpop.xlane.xlu0 %676
    %v678 = vrcp.pop %v668
    %v679 = vrcp.pop %v671
    %v680 = vrcp.pop %v674
    %v681 = vrcp.pop %v677
    %v682 = vmul.f32 %v659, %v678
    %v683 = vmul.f32 %v661, %v679
    %v684 = vmul.f32 %v663, %v680
    %v685 = vmul.f32 %v665, %v681
    %v686 = vpack.c.bf16 %v682, %v682
    %v687 = vpack.c.bf16 %v683, %v683
    %v688 = vpack.c.bf16 %v684, %v684
    %v689 = vpack.c.bf16 %v685, %v685
    %690 = vrot.lane.b32.xlu0 %v424, 64
    %v691 = vpop.permute.xlu0 %690
    %v693 = vsel %vm641, %v686, 0
    %v696 = vsel %vm214, %v691, 0
    %698 = vmatprep.subr.bf16.mxu0 0
    %699 = vmatpush1.bf16.msra.mxu0 %v696
    %700 = vmatprep.subr.bf16.mxu0 0
    %701 = vmatpush1.bf16.msra.mxu0 0
    %702 = vmatprep.subr.bf16.mxu0 0
    %703 = vmatpush1.bf16.msra.mxu0 0
    %704 = vmatprep.subr.bf16.mxu0 0
    %705 = vmatpush1.bf16.msra.mxu0 0
    %706 = vmatprep.subr.bf16.mxu0 0
    %707 = vmatpush1.bf16.msra.mxu0 0
    %708 = vmatprep.subr.bf16.mxu0 0
    %709 = vmatpush1.bf16.msra.mxu0 0
    %710 = vmatprep.subr.bf16.mxu0 0
    %711 = vmatpush1.bf16.msra.mxu0 0
    %712 = vmatprep.subr.bf16.mxu0 0
    %713 = vmatpush1.bf16.msra.mxu0 0
    %714 = vmatprep.subr.bf16.mxu0 0
    %715 = vmatpush1.bf16.msra.mxu0 0
    %716 = vmatprep.subr.bf16.mxu0 0
    %717 = vmatpush1.bf16.msra.mxu0 0
    %718 = vmatprep.subr.bf16.mxu0 0
    %719 = vmatpush1.bf16.msra.mxu0 0
    %720 = vmatprep.subr.bf16.mxu0 0
    %721 = vmatpush1.bf16.msra.mxu0 0
    %722 = vmatprep.subr.bf16.mxu0 0
    %723 = vmatpush1.bf16.msra.mxu0 0
    %724 = vmatprep.subr.bf16.mxu0 0
    %725 = vmatpush1.bf16.msra.mxu0 0
    %726 = vmatprep.subr.bf16.mxu0 0
    %727 = vmatpush1.bf16.msra.mxu0 0
    %728 = vmatprep.subr.bf16.mxu0 0
    %729 = vmatpush1.bf16.msra.mxu0 0
    %730 = vmatprep.mubr.bf16.mxu0 0
    %731 = vmatmul.mubr.bf16.gmra.mrb[0].mxu0 %v693
    %v732 = vpop.f32.mrb[0].mxu0
    %v733 = vadd.f32 0.0, %v732
    %v734 = vpop.f32.mrb[0].mxu0
    %v735 = vpop.f32.mrb[0].mxu0
    %v736 = vpop.f32.mrb[0].mxu0
    %737 = vdwg.mxu0
    %738 = vrot.lane.b32.xlu0 %v425, 64
    %v739 = vpop.permute.xlu0 %738
    %v741 = vsel %vm641, %v687, 0
    %v744 = vsel %vm214, %v739, 0
    %746 = vmatprep.subr.bf16.mxu0 0
    %747 = vmatpush1.bf16.msra.mxu0 %v744
    %748 = vmatprep.subr.bf16.mxu0 0
    %749 = vmatpush1.bf16.msra.mxu0 0
    %750 = vmatprep.subr.bf16.mxu0 0
    %751 = vmatpush1.bf16.msra.mxu0 0
    %752 = vmatprep.subr.bf16.mxu0 0
    %753 = vmatpush1.bf16.msra.mxu0 0
    %754 = vmatprep.subr.bf16.mxu0 0
    %755 = vmatpush1.bf16.msra.mxu0 0
    %756 = vmatprep.subr.bf16.mxu0 0
    %757 = vmatpush1.bf16.msra.mxu0 0
    %758 = vmatprep.subr.bf16.mxu0 0
    %759 = vmatpush1.bf16.msra.mxu0 0
    %760 = vmatprep.subr.bf16.mxu0 0
    %761 = vmatpush1.bf16.msra.mxu0 0
    %762 = vmatprep.subr.bf16.mxu0 0
    %763 = vmatpush1.bf16.msra.mxu0 0
    %764 = vmatprep.subr.bf16.mxu0 0
    %765 = vmatpush1.bf16.msra.mxu0 0
    %766 = vmatprep.subr.bf16.mxu0 0
    %767 = vmatpush1.bf16.msra.mxu0 0
    %768 = vmatprep.subr.bf16.mxu0 0
    %769 = vmatpush1.bf16.msra.mxu0 0
    %770 = vmatprep.subr.bf16.mxu0 0
    %771 = vmatpush1.bf16.msra.mxu0 0
    %772 = vmatprep.subr.bf16.mxu0 0
    %773 = vmatpush1.bf16.msra.mxu0 0
    %774 = vmatprep.subr.bf16.mxu0 0
    %775 = vmatpush1.bf16.msra.mxu0 0
    %776 = vmatprep.subr.bf16.mxu0 0
    %777 = vmatpush1.bf16.msra.mxu0 0
    %778 = vmatprep.mubr.bf16.mxu0 0
    %779 = vmatmul.mubr.bf16.gmra.mrb[0].mxu0 %v741
    %v780 = vpop.f32.mrb[0].mxu0
    %v781 = vadd.f32 0.0, %v780
    %v782 = vpop.f32.mrb[0].mxu0
    %v783 = vpop.f32.mrb[0].mxu0
    %v784 = vpop.f32.mrb[0].mxu0
    %785 = vdwg.mxu0
    %786 = vrot.lane.b32.xlu0 %v426, 64
    %v787 = vpop.permute.xlu0 %786
    %v789 = vsel %vm641, %v688, 0
    %v792 = vsel %vm214, %v787, 0
    %794 = vmatprep.subr.bf16.mxu0 0
    %795 = vmatpush1.bf16.msra.mxu0 %v792
    %796 = vmatprep.subr.bf16.mxu0 0
    %797 = vmatpush1.bf16.msra.mxu0 0
    %798 = vmatprep.subr.bf16.mxu0 0
    %799 = vmatpush1.bf16.msra.mxu0 0
    %800 = vmatprep.subr.bf16.mxu0 0
    %801 = vmatpush1.bf16.msra.mxu0 0
    %802 = vmatprep.subr.bf16.mxu0 0
    %803 = vmatpush1.bf16.msra.mxu0 0
    %804 = vmatprep.subr.bf16.mxu0 0
    %805 = vmatpush1.bf16.msra.mxu0 0
    %806 = vmatprep.subr.bf16.mxu0 0
    %807 = vmatpush1.bf16.msra.mxu0 0
    %808 = vmatprep.subr.bf16.mxu0 0
    %809 = vmatpush1.bf16.msra.mxu0 0
    %810 = vmatprep.subr.bf16.mxu0 0
    %811 = vmatpush1.bf16.msra.mxu0 0
    %812 = vmatprep.subr.bf16.mxu0 0
    %813 = vmatpush1.bf16.msra.mxu0 0
    %814 = vmatprep.subr.bf16.mxu0 0
    %815 = vmatpush1.bf16.msra.mxu0 0
    %816 = vmatprep.subr.bf16.mxu0 0
    %817 = vmatpush1.bf16.msra.mxu0 0
    %818 = vmatprep.subr.bf16.mxu0 0
    %819 = vmatpush1.bf16.msra.mxu0 0
    %820 = vmatprep.subr.bf16.mxu0 0
    %821 = vmatpush1.bf16.msra.mxu0 0
    %822 = vmatprep.subr.bf16.mxu0 0
    %823 = vmatpush1.bf16.msra.mxu0 0
    %824 = vmatprep.subr.bf16.mxu0 0
    %825 = vmatpush1.bf16.msra.mxu0 0
    %826 = vmatprep.mubr.bf16.mxu0 0
    %827 = vmatmul.mubr.bf16.gmra.mrb[0].mxu0 %v789
    %v828 = vpop.f32.mrb[0].mxu0
    %v829 = vadd.f32 0.0, %v828
    %v830 = vpop.f32.mrb[0].mxu0
    %v831 = vpop.f32.mrb[0].mxu0
    %v832 = vpop.f32.mrb[0].mxu0
    %833 = vdwg.mxu0
    %834 = vrot.lane.b32.xlu0 %v427, 64
    %v835 = vpop.permute.xlu0 %834
    %v837 = vsel %vm641, %v689, 0
    %v840 = vsel %vm214, %v835, 0
    %842 = vmatprep.subr.bf16.mxu0 0
    %843 = vmatpush1.bf16.msra.mxu0 %v840
    %844 = vmatprep.subr.bf16.mxu0 0
    %845 = vmatpush1.bf16.msra.mxu0 0
    %846 = vmatprep.subr.bf16.mxu0 0
    %847 = vmatpush1.bf16.msra.mxu0 0
    %848 = vmatprep.subr.bf16.mxu0 0
    %849 = vmatpush1.bf16.msra.mxu0 0
    %850 = vmatprep.subr.bf16.mxu0 0
    %851 = vmatpush1.bf16.msra.mxu0 0
    %852 = vmatprep.subr.bf16.mxu0 0
    %853 = vmatpush1.bf16.msra.mxu0 0
    %854 = vmatprep.subr.bf16.mxu0 0
    %855 = vmatpush1.bf16.msra.mxu0 0
    %856 = vmatprep.subr.bf16.mxu0 0
    %857 = vmatpush1.bf16.msra.mxu0 0
    %858 = vmatprep.subr.bf16.mxu0 0
    %859 = vmatpush1.bf16.msra.mxu0 0
    %860 = vmatprep.subr.bf16.mxu0 0
    %861 = vmatpush1.bf16.msra.mxu0 0
    %862 = vmatprep.subr.bf16.mxu0 0
    %863 = vmatpush1.bf16.msra.mxu0 0
    %864 = vmatprep.subr.bf16.mxu0 0
    %865 = vmatpush1.bf16.msra.mxu0 0
    %866 = vmatprep.subr.bf16.mxu0 0
    %867 = vmatpush1.bf16.msra.mxu0 0
    %868 = vmatprep.subr.bf16.mxu0 0
    %869 = vmatpush1.bf16.msra.mxu0 0
    %870 = vmatprep.subr.bf16.mxu0 0
    %871 = vmatpush1.bf16.msra.mxu0 0
    %872 = vmatprep.subr.bf16.mxu0 0
    %873 = vmatpush1.bf16.msra.mxu0 0
    %874 = vmatprep.mubr.bf16.mxu0 0
    %875 = vmatmul.mubr.bf16.gmra.mrb[0].mxu0 %v837
    %v876 = vpop.f32.mrb[0].mxu0
    %v877 = vadd.f32 0.0, %v876
    %v878 = vpop.f32.mrb[0].mxu0
    %v879 = vpop.f32.mrb[0].mxu0
    %v880 = vpop.f32.mrb[0].mxu0
    %881 = vdwg.mxu0
    %883 = vrot.lane.b32.xlu0 %v781, 16
    %v884 = vpop.permute.xlu0 %883
    %v886 = vsel %vm431, %v733, %v884
    %888 = vrot.lane.b32.xlu0 %v877, 16
    %v889 = vpop.permute.xlu0 %888
    %v891 = vsel %vm431, %v829, %v889
    %v892 = vld [vmem:[%s10] sm:$0xf]
    %v893 = vld [vmem:[%s10 + $0x4] sm:$0xf]
    %v894 = vld [vmem:[%s10 + $0x8] sm:$0xf]
    %v895 = vld [vmem:[%s10 + $0xc] sm:$0xf]
    %v896 = vpack.c.bf16 %v891, %v886
    %v897 = vld [vmem:[%s11] sm:$0x1]
    %v899 = vlaneseq
    %v900 = vshrl.u32 %v899, 7
    %v901 = vsub.s32 0, %v900
    %v902 = vrot.slane %v897, %v901
    %v908 = vunpack.c.l.b16 %v892
    %v909 = vunpack.c.l.b16 %v893
    %v910 = vunpack.c.l.b16 %v894
    %v911 = vunpack.c.l.b16 %v895
    %v912 = vpack.c.b16 %v909, %v908
    %v913 = vpack.c.b16 %v911, %v910
    %v917 = vsel %vm297, %v896, 0
    %919 = vmatprep.subr.bf16.mxu0 0
    %920 = vmatpush1.bf16.msra.mxu0 %v912
    %921 = vmatprep.subr.bf16.mxu0 0
    %922 = vmatpush1.bf16.msra.mxu0 %v913
    %923 = vmatprep.subr.bf16.mxu0 0
    %924 = vmatpush1.bf16.msra.mxu0 0
    %925 = vmatprep.subr.bf16.mxu0 0
    %926 = vmatpush1.bf16.msra.mxu0 0
    %927 = vmatprep.subr.bf16.mxu0 0
    %928 = vmatpush1.bf16.msra.mxu0 0
    %929 = vmatprep.subr.bf16.mxu0 0
    %930 = vmatpush1.bf16.msra.mxu0 0
    %931 = vmatprep.subr.bf16.mxu0 0
    %932 = vmatpush1.bf16.msra.mxu0 0
    %933 = vmatprep.subr.bf16.mxu0 0
    %934 = vmatpush1.bf16.msra.mxu0 0
    %935 = vmatprep.subr.bf16.mxu0 0
    %936 = vmatpush1.bf16.msra.mxu0 0
    %937 = vmatprep.subr.bf16.mxu0 0
    %938 = vmatpush1.bf16.msra.mxu0 0
    %939 = vmatprep.subr.bf16.mxu0 0
    %940 = vmatpush1.bf16.msra.mxu0 0
    %941 = vmatprep.subr.bf16.mxu0 0
    %942 = vmatpush1.bf16.msra.mxu0 0
    %943 = vmatprep.subr.bf16.mxu0 0
    %944 = vmatpush1.bf16.msra.mxu0 0
    %945 = vmatprep.subr.bf16.mxu0 0
    %946 = vmatpush1.bf16.msra.mxu0 0
    %947 = vmatprep.subr.bf16.mxu0 0
    %948 = vmatpush1.bf16.msra.mxu0 0
    %949 = vmatprep.subr.bf16.mxu0 0
    %950 = vmatpush1.bf16.msra.mxu0 0
    %951 = vmatprep.mubr.bf16.mxu0 0
    %952 = vmatmul.mubr.bf16.gmra.mrb[0].mxu0 %v917
    %v953 = vpop.f32.mrb[0].mxu0
    %v954 = vadd.f32 %v902, %v953
    %v955 = vpop.f32.mrb[0].mxu0
    %v956 = vpop.f32.mrb[0].mxu0
    %v957 = vadd.f32 %v902, %v956
    %v958 = vpop.f32.mrb[0].mxu0
    %959 = vdwg.mxu0
    %v960 = vadd.f32 %v954, %v339
    %v961 = vadd.f32 %v957, %v340
    %v962 = vld [vmem:[%s12] sm:$0x1]
    %v963 = vld [vmem:[%s13] sm:$0x1]
    %v964 = vsel %vm297, %v960, 0.0
    %965 = vadd.xlane.f32.xlu0 %v964
    %v966 = vpop.xlane.xlu0 %965
    %v967 = vsel %vm297, %v961, 0.0
    %968 = vadd.xlane.f32.xlu0 %v967
    %v969 = vpop.xlane.xlu0 %968
    %v970 = vmul.f32 %v966, %v304
    %v971 = vmul.f32 %v969, %v304
    %v972 = vsub.f32 %v960, %v970
    %v973 = vsub.f32 %v961, %v971
    %v974 = vmul.f32 %v972, %v972
    %v975 = vmul.f32 %v973, %v973
    %v976 = vsel %vm297, %v974, 0.0
    %977 = vadd.xlane.f32.xlu0 %v976
    %v978 = vpop.xlane.xlu0 %977
    %v979 = vsel %vm297, %v975, 0.0
    %980 = vadd.xlane.f32.xlu0 %v979
    %v981 = vpop.xlane.xlu0 %980
    %v982 = vmul.f32 %v978, %v304
    %v983 = vmul.f32 %v981, %v304
    %v984 = vadd.f32 %v982, 1e-12
    %v985 = vadd.f32 %v983, 1e-12
    %v986 = vrsqrt.pop %v984
    %v987 = vrsqrt.pop %v985
    %v988 = vmul.f32 %v972, %v986
    %v989 = vmul.f32 %v973, %v987
    %v991 = vlaneseq
    %v992 = vshrl.u32 %v991, 7
    %v993 = vsub.s32 0, %v992
    %v994 = vrot.slane %v962, %v993
    %v996 = vmul.f32 %v988, %v994
    %v997 = vmul.f32 %v989, %v994
    %v999 = vlaneseq
    %v1000 = vshrl.u32 %v999, 7
    %v1001 = vsub.s32 0, %v1000
    %v1002 = vrot.slane %v963, %v1001
    %v1004 = vadd.f32 %v996, %v1002
    %v1005 = vadd.f32 %v997, %v1002
    %v1006 = vld [vmem:[%s14] sm:$0xf]
    %v1007 = vld [vmem:[%s14 + $0x4] sm:$0xf]
    %v1008 = vld [vmem:[%s14 + $0x8] sm:$0xf]
    %v1009 = vld [vmem:[%s14 + $0xc] sm:$0xf]
    %v1010 = vpack.c.bf16 %v1005, %v1004
    %v1011 = vld [vmem:[%s15] sm:$0x1]
    %v1013 = vlaneseq
    %v1014 = vshrl.u32 %v1013, 7
    %v1015 = vsub.s32 0, %v1014
    %v1016 = vrot.slane %v1011, %v1015
    %v1022 = vunpack.c.l.b16 %v1006
    %v1023 = vunpack.c.l.b16 %v1007
    %v1024 = vunpack.c.l.b16 %v1008
    %v1025 = vunpack.c.l.b16 %v1009
    %v1026 = vpack.c.b16 %v1023, %v1022
    %v1027 = vpack.c.b16 %v1025, %v1024
    %v1031 = vsel %vm297, %v1010, 0
    %1033 = vmatprep.subr.bf16.mxu0 0
    %1034 = vmatpush1.bf16.msra.mxu0 %v1026
    %1035 = vmatprep.subr.bf16.mxu0 0
    %1036 = vmatpush1.bf16.msra.mxu0 %v1027
    %1037 = vmatprep.subr.bf16.mxu0 0
    %1038 = vmatpush1.bf16.msra.mxu0 0
    %1039 = vmatprep.subr.bf16.mxu0 0
    %1040 = vmatpush1.bf16.msra.mxu0 0
    %1041 = vmatprep.subr.bf16.mxu0 0
    %1042 = vmatpush1.bf16.msra.mxu0 0
    %1043 = vmatprep.subr.bf16.mxu0 0
    %1044 = vmatpush1.bf16.msra.mxu0 0
    %1045 = vmatprep.subr.bf16.mxu0 0
    %1046 = vmatpush1.bf16.msra.mxu0 0
    %1047 = vmatprep.subr.bf16.mxu0 0
    %1048 = vmatpush1.bf16.msra.mxu0 0
    %1049 = vmatprep.subr.bf16.mxu0 0
    %1050 = vmatpush1.bf16.msra.mxu0 0
    %1051 = vmatprep.subr.bf16.mxu0 0
    %1052 = vmatpush1.bf16.msra.mxu0 0
    %1053 = vmatprep.subr.bf16.mxu0 0
    %1054 = vmatpush1.bf16.msra.mxu0 0
    %1055 = vmatprep.subr.bf16.mxu0 0
    %1056 = vmatpush1.bf16.msra.mxu0 0
    %1057 = vmatprep.subr.bf16.mxu0 0
    %1058 = vmatpush1.bf16.msra.mxu0 0
    %1059 = vmatprep.subr.bf16.mxu0 0
    %1060 = vmatpush1.bf16.msra.mxu0 0
    %1061 = vmatprep.subr.bf16.mxu0 0
    %1062 = vmatpush1.bf16.msra.mxu0 0
    %1063 = vmatprep.subr.bf16.mxu0 0
    %1064 = vmatpush1.bf16.msra.mxu0 0
    %1065 = vmatprep.mubr.bf16.mxu0 0
    %1066 = vmatmul.mubr.bf16.gmra.mrb[0].mxu0 %v1031
    %v1067 = vpop.f32.mrb[0].mxu0
    %v1068 = vadd.f32 %v1016, %v1067
    %v1069 = vpop.f32.mrb[0].mxu0
    %v1070 = vpop.f32.mrb[0].mxu0
    %v1071 = vadd.f32 %v1016, %v1070
    %v1072 = vpop.f32.mrb[0].mxu0
    %1073 = vdwg.mxu0
    %v1074 = vmul.f32 %v1068, 0.5
    %v1075 = vmul.f32 %v1071, 0.5
    %v1076 = vmul.f32 %v1068, 0.044715
    %v1077 = vmul.f32 %v1071, 0.044715
    %v1078 = vmul.f32 %v1076, %v1068
    %v1079 = vmul.f32 %v1077, %v1071
    %v1080 = vmul.f32 %v1078, %v1068
    %v1081 = vmul.f32 %v1079, %v1071
    %v1082 = vadd.f32 %v1068, %v1080
    %v1083 = vadd.f32 %v1071, %v1081
    %v1084 = vmul.f32 %v1082, 0.7978846
    %v1085 = vmul.f32 %v1083, 0.7978846
    %v1086 = vtanh.pop %v1084
    %v1087 = vtanh.pop %v1085
    %v1088 = vadd.f32 %v1086, 1.0
    %v1089 = vadd.f32 %v1087, 1.0
    %v1090 = vmul.f32 %v1074, %v1088
    %v1091 = vmul.f32 %v1075, %v1089
    %v1092 = vld [vmem:[%s16] sm:$0xf]
    %v1093 = vld [vmem:[%s16 + $0x4] sm:$0xf]
    %v1094 = vld [vmem:[%s16 + $0x8] sm:$0xf]
    %v1095 = vld [vmem:[%s16 + $0xc] sm:$0xf]
    %v1096 = vld [vmem:[%s16 + $0x10] sm:$0xf]
    %v1097 = vld [vmem:[%s16 + $0x14] sm:$0xf]
    %v1098 = vld [vmem:[%s16 + $0x18] sm:$0xf]
    %v1099 = vld [vmem:[%s16 + $0x1c] sm:$0xf]
    %v1100 = vpack.c.bf16 %v1091, %v1090
    %v1101 = vld [vmem:[%s17] sm:$0x1]
    %v1103 = vlaneseq
    %v1104 = vshrl.u32 %v1103, 7
    %v1105 = vsub.s32 0, %v1104
    %v1106 = vrot.slane %v1101, %v1105
    %v1116 = vunpack.c.l.b16 %v1092
    %v1117 = vunpack.c.l.b16 %v1093
    %v1118 = vunpack.c.l.b16 %v1094
    %v1119 = vunpack.c.l.b16 %v1095
    %v1120 = vunpack.c.l.b16 %v1096
    %v1121 = vunpack.c.l.b16 %v1097
    %v1122 = vunpack.c.l.b16 %v1098
    %v1123 = vunpack.c.l.b16 %v1099
    %v1124 = vpack.c.b16 %v1117, %v1116
    %v1125 = vpack.c.b16 %v1119, %v1118
    %v1126 = vpack.c.b16 %v1121, %v1120
    %v1127 = vpack.c.b16 %v1123, %v1122
    %vm1132 = vcmask 523264
    %v1134 = vsel %vm1132, %v1100, 0
    %1136 = vmatprep.subr.bf16.mxu0 0
    %1137 = vmatpush1.bf16.msra.mxu0 %v1124
    %1138 = vmatprep.subr.bf16.mxu0 0
    %1139 = vmatpush1.bf16.msra.mxu0 %v1125
    %1140 = vmatprep.subr.bf16.mxu0 0
    %1141 = vmatpush1.bf16.msra.mxu0 %v1126
    %1142 = vmatprep.subr.bf16.mxu0 0
    %1143 = vmatpush1.bf16.msra.mxu0 %v1127
    %1144 = vmatprep.subr.bf16.mxu0 0
    %1145 = vmatpush1.bf16.msra.mxu0 0
    %1146 = vmatprep.subr.bf16.mxu0 0
    %1147 = vmatpush1.bf16.msra.mxu0 0
    %1148 = vmatprep.subr.bf16.mxu0 0
    %1149 = vmatpush1.bf16.msra.mxu0 0
    %1150 = vmatprep.subr.bf16.mxu0 0
    %1151 = vmatpush1.bf16.msra.mxu0 0
    %1152 = vmatprep.subr.bf16.mxu0 0
    %1153 = vmatpush1.bf16.msra.mxu0 0
    %1154 = vmatprep.subr.bf16.mxu0 0
    %1155 = vmatpush1.bf16.msra.mxu0 0
    %1156 = vmatprep.subr.bf16.mxu0 0
    %1157 = vmatpush1.bf16.msra.mxu0 0
    %1158 = vmatprep.subr.bf16.mxu0 0
    %1159 = vmatpush1.bf16.msra.mxu0 0
    %1160 = vmatprep.subr.bf16.mxu0 0
    %1161 = vmatpush1.bf16.msra.mxu0 0
    %1162 = vmatprep.subr.bf16.mxu0 0
    %1163 = vmatpush1.bf16.msra.mxu0 0
    %1164 = vmatprep.subr.bf16.mxu0 0
    %1165 = vmatpush1.bf16.msra.mxu0 0
    %1166 = vmatprep.subr.bf16.mxu0 0
    %1167 = vmatpush1.bf16.msra.mxu0 0
    %1168 = vmatprep.mubr.bf16.mxu0 0
    %1169 = vmatmul.mubr.bf16.gmra.mrb[0].mxu0 %v1134
    %v1170 = vpop.f32.mrb[0].mxu0
    %v1171 = vadd.f32 %v1106, %v1170
    %v1172 = vpop.f32.mrb[0].mxu0
    %v1173 = vpop.f32.mrb[0].mxu0
    %v1174 = vadd.f32 %v1106, %v1173
    %v1175 = vpop.f32.mrb[0].mxu0
    %1176 = vdwg.mxu0
    %v1177 = vadd.f32 %v1171, %v1004
    %v1178 = vadd.f32 %v1174, %v1005
    %v1179 = vld [vmem:[%s18] sm:$0x1]
    %v1180 = vld [vmem:[%s19] sm:$0x1]
    %v1181 = vsel %vm297, %v1177, 0.0
    %1182 = vadd.xlane.f32.xlu0 %v1181
    %v1183 = vpop.xlane.xlu0 %1182
    %v1184 = vsel %vm297, %v1178, 0.0
    %1185 = vadd.xlane.f32.xlu0 %v1184
    %v1186 = vpop.xlane.xlu0 %1185
    %v1187 = vmul.f32 %v1183, %v304
    %v1188 = vmul.f32 %v1186, %v304
    %v1189 = vsub.f32 %v1177, %v1187
    %v1190 = vsub.f32 %v1178, %v1188
    %v1191 = vmul.f32 %v1189, %v1189
    %v1192 = vmul.f32 %v1190, %v1190
    %v1193 = vsel %vm297, %v1191, 0.0
    %1194 = vadd.xlane.f32.xlu0 %v1193
    %v1195 = vpop.xlane.xlu0 %1194
    %v1196 = vsel %vm297, %v1192, 0.0
    %1197 = vadd.xlane.f32.xlu0 %v1196
    %v1198 = vpop.xlane.xlu0 %1197
    %v1199 = vmul.f32 %v1195, %v304
    %v1200 = vmul.f32 %v1198, %v304
    %v1201 = vadd.f32 %v1199, 1e-12
    %v1202 = vadd.f32 %v1200, 1e-12
    %v1203 = vrsqrt.pop %v1201
    %v1204 = vrsqrt.pop %v1202
    %v1205 = vmul.f32 %v1189, %v1203
    %v1206 = vmul.f32 %v1190, %v1204
    %v1208 = vlaneseq
    %v1209 = vshrl.u32 %v1208, 7
    %v1210 = vsub.s32 0, %v1209
    %v1211 = vrot.slane %v1179, %v1210
    %v1213 = vmul.f32 %v1205, %v1211
    %v1214 = vmul.f32 %v1206, %v1211
    %v1216 = vlaneseq
    %v1217 = vshrl.u32 %v1216, 7
    %v1218 = vsub.s32 0, %v1217
    %v1219 = vrot.slane %v1180, %v1218
    %v1221 = vadd.f32 %v1213, %v1219
    %v1222 = vadd.f32 %v1214, %v1219
    %s1223 = scalar_lea.vmem %s8, 16
    %v1224 = vld [vmem:[%s1223] sm:$0xf]
    %v1225 = vld [vmem:[%s1223 + $0x4] sm:$0xf]
    %v1226 = vld [vmem:[%s1223 + $0x8] sm:$0xf]
    %v1227 = vld [vmem:[%s1223 + $0xc] sm:$0xf]
    %v1228 = vpack.c.bf16 %v1222, %v1221
    %s1229 = scalar_lea.vmem %s9, 1
    %v1230 = vld [vmem:[%s1229] sm:$0x1]
    %v1232 = vlaneseq
    %v1233 = vshrl.u32 %v1232, 7
    %v1234 = vsub.s32 0, %v1233
    %v1235 = vrot.slane %v1230, %v1234
    %v1241 = vunpack.c.l.b16 %v1224
    %v1242 = vunpack.c.l.b16 %v1225
    %v1243 = vunpack.c.l.b16 %v1226
    %v1244 = vunpack.c.l.b16 %v1227
    %v1245 = vpack.c.b16 %v1242, %v1241
    %v1246 = vpack.c.b16 %v1244, %v1243
    %v1250 = vsel %vm297, %v1228, 0
    %1252 = vmatprep.subr.bf16.mxu0 0
    %1253 = vmatpush1.bf16.msra.mxu0 %v1245
    %1254 = vmatprep.subr.bf16.mxu0 0
    %1255 = vmatpush1.bf16.msra.mxu0 %v1246
    %1256 = vmatprep.subr.bf16.mxu0 0
    %1257 = vmatpush1.bf16.msra.mxu0 0
    %1258 = vmatprep.subr.bf16.mxu0 0
    %1259 = vmatpush1.bf16.msra.mxu0 0
    %1260 = vmatprep.subr.bf16.mxu0 0
    %1261 = vmatpush1.bf16.msra.mxu0 0
    %1262 = vmatprep.subr.bf16.mxu0 0
    %1263 = vmatpush1.bf16.msra.mxu0 0
    %1264 = vmatprep.subr.bf16.mxu0 0
    %1265 = vmatpush1.bf16.msra.mxu0 0
    %1266 = vmatprep.subr.bf16.mxu0 0
    %1267 = vmatpush1.bf16.msra.mxu0 0
    %1268 = vmatprep.subr.bf16.mxu0 0
    %1269 = vmatpush1.bf16.msra.mxu0 0
    %1270 = vmatprep.subr.bf16.mxu0 0
    %1271 = vmatpush1.bf16.msra.mxu0 0
    %1272 = vmatprep.subr.bf16.mxu0 0
    %1273 = vmatpush1.bf16.msra.mxu0 0
    %1274 = vmatprep.subr.bf16.mxu0 0
    %1275 = vmatpush1.bf16.msra.mxu0 0
    %1276 = vmatprep.subr.bf16.mxu0 0
    %1277 = vmatpush1.bf16.msra.mxu0 0
    %1278 = vmatprep.subr.bf16.mxu0 0
    %1279 = vmatpush1.bf16.msra.mxu0 0
    %1280 = vmatprep.subr.bf16.mxu0 0
    %1281 = vmatpush1.bf16.msra.mxu0 0
    %1282 = vmatprep.subr.bf16.mxu0 0
    %1283 = vmatpush1.bf16.msra.mxu0 0
    %1284 = vmatprep.mubr.bf16.mxu0 0
    %1285 = vmatmul.mubr.bf16.gmra.mrb[0].mxu0 %v1250
    %v1286 = vpop.f32.mrb[0].mxu0
    %v1287 = vadd.f32 %v1235, %v1286
    %v1288 = vpop.f32.mrb[0].mxu0
    %v1289 = vpop.f32.mrb[0].mxu0
    %v1290 = vadd.f32 %v1235, %v1289
    %v1291 = vpop.f32.mrb[0].mxu0
    %1292 = vdwg.mxu0
    %1294 = vrot.lane.b32.xlu0 %v1287, 112
    %v1295 = vpop.permute.xlu0 %1294
    %1298 = vrot.lane.b32.xlu0 %v1290, 112
    %v1299 = vpop.permute.xlu0 %1298
    %v1301 = vpack.c.bf16 %v1287, %v1287
    %v1302 = vpack.c.bf16 %v1295, %v1295
    %v1303 = vpack.c.bf16 %v1290, %v1290
    %v1304 = vpack.c.bf16 %v1299, %v1299
    %1306 = vrot.lane.b32.xlu0 %v1301, 96
    %v1307 = vpop.permute.xlu0 %1306
    %v1309 = vsel %vm431, %v1301, 0
    %v1312 = vsel %vm431, %v1307, 0
    %1314 = vmatprep.subr.bf16.mxu0 0
    %1315 = vmatpush1.bf16.xpose.msra.mxu0 %v1312
    %1316 = vmatprep.subr.bf16.mxu0 0
    %1317 = vmatpush1.bf16.xpose.msra.mxu0 0
    %1318 = vmatprep.subr.bf16.mxu0 0
    %1319 = vmatpush1.bf16.xpose.msra.mxu0 0
    %1320 = vmatprep.subr.bf16.mxu0 0
    %1321 = vmatpush1.bf16.xpose.msra.mxu0 0
    %1322 = vmatprep.subr.bf16.mxu0 0
    %1323 = vmatpush1.bf16.xpose.msra.mxu0 0
    %1324 = vmatprep.subr.bf16.mxu0 0
    %1325 = vmatpush1.bf16.xpose.msra.mxu0 0
    %1326 = vmatprep.subr.bf16.mxu0 0
    %1327 = vmatpush1.bf16.xpose.msra.mxu0 0
    %1328 = vmatprep.subr.bf16.mxu0 0
    %1329 = vmatpush1.bf16.xpose.msra.mxu0 0
    %1330 = vmatprep.subr.bf16.mxu0 0
    %1331 = vmatpush1.bf16.xpose.msra.mxu0 0
    %1332 = vmatprep.subr.bf16.mxu0 0
    %1333 = vmatpush1.bf16.xpose.msra.mxu0 0
    %1334 = vmatprep.subr.bf16.mxu0 0
    %1335 = vmatpush1.bf16.xpose.msra.mxu0 0
    %1336 = vmatprep.subr.bf16.mxu0 0
    %1337 = vmatpush1.bf16.xpose.msra.mxu0 0
    %1338 = vmatprep.subr.bf16.mxu0 0
    %1339 = vmatpush1.bf16.xpose.msra.mxu0 0
    %1340 = vmatprep.subr.bf16.mxu0 0
    %1341 = vmatpush1.bf16.xpose.msra.mxu0 0
    %1342 = vmatprep.subr.bf16.mxu0 0
    %1343 = vmatpush1.bf16.xpose.msra.mxu0 0
    %1344 = vmatprep.subr.bf16.mxu0 0
    %1345 = vmatpush1.bf16.xpose.msra.mxu0 0
    %1346 = vmatprep.mubr.bf16.mxu0 0
    %1347 = vmatmul.mubr.bf16.gmra.mrb[0].mxu0 %v1309
    %v1348 = vpop.f32.mrb[0].mxu0
    %v1349 = vadd.f32 0.0, %v1348
    %v1350 = vpop.f32.mrb[0].mxu0
    %v1351 = vpop.f32.mrb[0].mxu0
    %v1352 = vpop.f32.mrb[0].mxu0
    %1353 = vdwg.mxu0
    %1355 = vrot.lane.b32.xlu0 %v1302, 96
    %v1356 = vpop.permute.xlu0 %1355
    %v1358 = vsel %vm431, %v1302, 0
    %v1361 = vsel %vm431, %v1356, 0
    %1363 = vmatprep.subr.bf16.mxu0 0
    %1364 = vmatpush1.bf16.xpose.msra.mxu0 %v1361
    %1365 = vmatprep.subr.bf16.mxu0 0
    %1366 = vmatpush1.bf16.xpose.msra.mxu0 0
    %1367 = vmatprep.subr.bf16.mxu0 0
    %1368 = vmatpush1.bf16.xpose.msra.mxu0 0
    %1369 = vmatprep.subr.bf16.mxu0 0
    %1370 = vmatpush1.bf16.xpose.msra.mxu0 0
    %1371 = vmatprep.subr.bf16.mxu0 0
    %1372 = vmatpush1.bf16.xpose.msra.mxu0 0
    %1373 = vmatprep.subr.bf16.mxu0 0
    %1374 = vmatpush1.bf16.xpose.msra.mxu0 0
    %1375 = vmatprep.subr.bf16.mxu0 0
    %1376 = vmatpush1.bf16.xpose.msra.mxu0 0
    %1377 = vmatprep.subr.bf16.mxu0 0
    %1378 = vmatpush1.bf16.xpose.msra.mxu0 0
    %1379 = vmatprep.subr.bf16.mxu0 0
    %1380 = vmatpush1.bf16.xpose.msra.mxu0 0
    %1381 = vmatprep.subr.bf16.mxu0 0
    %1382 = vmatpush1.bf16.xpose.msra.mxu0 0
    %1383 = vmatprep.subr.bf16.mxu0 0
    %1384 = vmatpush1.bf16.xpose.msra.mxu0 0
    %1385 = vmatprep.subr.bf16.mxu0 0
    %1386 = vmatpush1.bf16.xpose.msra.mxu0 0
    %1387 = vmatprep.subr.bf16.mxu0 0
    %1388 = vmatpush1.bf16.xpose.msra.mxu0 0
    %1389 = vmatprep.subr.bf16.mxu0 0
    %1390 = vmatpush1.bf16.xpose.msra.mxu0 0
    %1391 = vmatprep.subr.bf16.mxu0 0
    %1392 = vmatpush1.bf16.xpose.msra.mxu0 0
    %1393 = vmatprep.subr.bf16.mxu0 0
    %1394 = vmatpush1.bf16.xpose.msra.mxu0 0
    %1395 = vmatprep.mubr.bf16.mxu0 0
    %1396 = vmatmul.mubr.bf16.gmra.mrb[0].mxu0 %v1358
    %v1397 = vpop.f32.mrb[0].mxu0
    %v1398 = vadd.f32 0.0, %v1397
    %v1399 = vpop.f32.mrb[0].mxu0
    %v1400 = vpop.f32.mrb[0].mxu0
    %v1401 = vpop.f32.mrb[0].mxu0
    %1402 = vdwg.mxu0
    %1404 = vrot.lane.b32.xlu0 %v1303, 96
    %v1405 = vpop.permute.xlu0 %1404
    %v1407 = vsel %vm431, %v1303, 0
    %v1410 = vsel %vm431, %v1405, 0
    %1412 = vmatprep.subr.bf16.mxu0 0
    %1413 = vmatpush1.bf16.xpose.msra.mxu0 %v1410
    %1414 = vmatprep.subr.bf16.mxu0 0
    %1415 = vmatpush1.bf16.xpose.msra.mxu0 0
    %1416 = vmatprep.subr.bf16.mxu0 0
    %1417 = vmatpush1.bf16.xpose.msra.mxu0 0
    %1418 = vmatprep.subr.bf16.mxu0 0
    %1419 = vmatpush1.bf16.xpose.msra.mxu0 0
    %1420 = vmatprep.subr.bf16.mxu0 0
    %1421 = vmatpush1.bf16.xpose.msra.mxu0 0
    %1422 = vmatprep.subr.bf16.mxu0 0
    %1423 = vmatpush1.bf16.xpose.msra.mxu0 0
    %1424 = vmatprep.subr.bf16.mxu0 0
    %1425 = vmatpush1.bf16.xpose.msra.mxu0 0
    %1426 = vmatprep.subr.bf16.mxu0 0
    %1427 = vmatpush1.bf16.xpose.msra.mxu0 0
    %1428 = vmatprep.subr.bf16.mxu0 0
    %1429 = vmatpush1.bf16.xpose.msra.mxu0 0
    %1430 = vmatprep.subr.bf16.mxu0 0
    %1431 = vmatpush1.bf16.xpose.msra.mxu0 0
    %1432 = vmatprep.subr.bf16.mxu0 0
    %1433 = vmatpush1.bf16.xpose.msra.mxu0 0
    %1434 = vmatprep.subr.bf16.mxu0 0
    %1435 = vmatpush1.bf16.xpose.msra.mxu0 0
    %1436 = vmatprep.subr.bf16.mxu0 0
    %1437 = vmatpush1.bf16.xpose.msra.mxu0 0
    %1438 = vmatprep.subr.bf16.mxu0 0
    %1439 = vmatpush1.bf16.xpose.msra.mxu0 0
    %1440 = vmatprep.subr.bf16.mxu0 0
    %1441 = vmatpush1.bf16.xpose.msra.mxu0 0
    %1442 = vmatprep.subr.bf16.mxu0 0
    %1443 = vmatpush1.bf16.xpose.msra.mxu0 0
    %1444 = vmatprep.mubr.bf16.mxu0 0
    %1445 = vmatmul.mubr.bf16.gmra.mrb[0].mxu0 %v1407
    %v1446 = vpop.f32.mrb[0].mxu0
    %v1447 = vadd.f32 0.0, %v1446
    %v1448 = vpop.f32.mrb[0].mxu0
    %v1449 = vpop.f32.mrb[0].mxu0
    %v1450 = vpop.f32.mrb[0].mxu0
    %1451 = vdwg.mxu0
    %1453 = vrot.lane.b32.xlu0 %v1304, 96
    %v1454 = vpop.permute.xlu0 %1453
    %v1456 = vsel %vm431, %v1304, 0
    %v1459 = vsel %vm431, %v1454, 0
    %1461 = vmatprep.subr.bf16.mxu0 0
    %1462 = vmatpush1.bf16.xpose.msra.mxu0 %v1459
    %1463 = vmatprep.subr.bf16.mxu0 0
    %1464 = vmatpush1.bf16.xpose.msra.mxu0 0
    %1465 = vmatprep.subr.bf16.mxu0 0
    %1466 = vmatpush1.bf16.xpose.msra.mxu0 0
    %1467 = vmatprep.subr.bf16.mxu0 0
    %1468 = vmatpush1.bf16.xpose.msra.mxu0 0
    %1469 = vmatprep.subr.bf16.mxu0 0
    %1470 = vmatpush1.bf16.xpose.msra.mxu0 0
    %1471 = vmatprep.subr.bf16.mxu0 0
    %1472 = vmatpush1.bf16.xpose.msra.mxu0 0
    %1473 = vmatprep.subr.bf16.mxu0 0
    %1474 = vmatpush1.bf16.xpose.msra.mxu0 0
    %1475 = vmatprep.subr.bf16.mxu0 0
    %1476 = vmatpush1.bf16.xpose.msra.mxu0 0
    %1477 = vmatprep.subr.bf16.mxu0 0
    %1478 = vmatpush1.bf16.xpose.msra.mxu0 0
    %1479 = vmatprep.subr.bf16.mxu0 0
    %1480 = vmatpush1.bf16.xpose.msra.mxu0 0
    %1481 = vmatprep.subr.bf16.mxu0 0
    %1482 = vmatpush1.bf16.xpose.msra.mxu0 0
    %1483 = vmatprep.subr.bf16.mxu0 0
    %1484 = vmatpush1.bf16.xpose.msra.mxu0 0
    %1485 = vmatprep.subr.bf16.mxu0 0
    %1486 = vmatpush1.bf16.xpose.msra.mxu0 0
    %1487 = vmatprep.subr.bf16.mxu0 0
    %1488 = vmatpush1.bf16.xpose.msra.mxu0 0
    %1489 = vmatprep.subr.bf16.mxu0 0
    %1490 = vmatpush1.bf16.xpose.msra.mxu0 0
    %1491 = vmatprep.subr.bf16.mxu0 0
    %1492 = vmatpush1.bf16.xpose.msra.mxu0 0
    %1493 = vmatprep.mubr.bf16.mxu0 0
    %1494 = vmatmul.mubr.bf16.gmra.mrb[0].mxu0 %v1456
    %v1495 = vpop.f32.mrb[0].mxu0
    %v1496 = vadd.f32 0.0, %v1495
    %v1497 = vpop.f32.mrb[0].mxu0
    %v1498 = vpop.f32.mrb[0].mxu0
    %v1499 = vpop.f32.mrb[0].mxu0
    %1500 = vdwg.mxu0
    %v1501 = vmul.f32 %v1349, 0.25
    %v1502 = vmul.f32 %v1398, 0.25
    %v1503 = vmul.f32 %v1447, 0.25
    %v1504 = vmul.f32 %v1496, 0.25
    %v1505 = vadd.f32 %v1501, %v632
    %v1506 = vadd.f32 %v1502, %v632
    %v1507 = vadd.f32 %v1503, %v636
    %v1508 = vadd.f32 %v1504, %v636
    %v1509 = vsel %vm641, %v1505, -inf
    %1510 = vmax.xlane.f32.xlu0 %v1509
    %v1511 = vpop.xlane.xlu0 %1510
    %v1512 = vsel %vm641, %v1506, -inf
    %1513 = vmax.xlane.f32.xlu0 %v1512
    %v1514 = vpop.xlane.xlu0 %1513
    %v1515 = vsel %vm641, %v1507, -inf
    %1516 = vmax.xlane.f32.xlu0 %v1515
    %v1517 = vpop.xlane.xlu0 %1516
    %v1518 = vsel %vm641, %v1508, -inf
    %1519 = vmax.xlane.f32.xlu0 %v1518
    %v1520 = vpop.xlane.xlu0 %1519
    %v1521 = vsub.f32 %v1505, %v1511
    %v1522 = vsub.f32 %v1506, %v1514
    %v1523 = vsub.f32 %v1507, %v1517
    %v1524 = vsub.f32 %v1508, %v1520
    %v1525 = vmul.f32 %v1521, 1.442695
    %v1526 = vpow.pop %v1525
    %v1527 = vmul.f32 %v1522, 1.442695
    %v1528 = vpow.pop %v1527
    %v1529 = vmul.f32 %v1523, 1.442695
    %v1530 = vpow.pop %v1529
    %v1531 = vmul.f32 %v1524, 1.442695
    %v1532 = vpow.pop %v1531
    %v1533 = vsel %vm641, %v1526, 0.0
    %1534 = vadd.xlane.f32.xlu0 %v1533
    %v1535 = vpop.xlane.xlu0 %1534
    %v1536 = vsel %vm641, %v1528, 0.0
    %1537 = vadd.xlane.f32.xlu0 %v1536
    %v1538 = vpop.xlane.xlu0 %1537
    %v1539 = vsel %vm641, %v1530, 0.0
    %1540 = vadd.xlane.f32.xlu0 %v1539
    %v1541 = vpop.xlane.xlu0 %1540
    %v1542 = vsel %vm641, %v1532, 0.0
    %1543 = vadd.xlane.f32.xlu0 %v1542
    %v1544 = vpop.xlane.xlu0 %1543
    %v1545 = vrcp.pop %v1535
    %v1546 = vrcp.pop %v1538
    %v1547 = vrcp.pop %v1541
    %v1548 = vrcp.pop %v1544
    %v1549 = vmul.f32 %v1526, %v1545
    %v1550 = vmul.f32 %v1528, %v1546
    %v1551 = vmul.f32 %v1530, %v1547
    %v1552 = vmul.f32 %v1532, %v1548
    %v1553 = vpack.c.bf16 %v1549, %v1549
    %v1554 = vpack.c.bf16 %v1550, %v1550
    %v1555 = vpack.c.bf16 %v1551, %v1551
    %v1556 = vpack.c.bf16 %v1552, %v1552
    %1557 = vrot.lane.b32.xlu0 %v1301, 64
    %v1558 = vpop.permute.xlu0 %1557
    %v1560 = vsel %vm641, %v1553, 0
    %v1563 = vsel %vm214, %v1558, 0
    %1565 = vmatprep.subr.bf16.mxu0 0
    %1566 = vmatpush1.bf16.msra.mxu0 %v1563
    %1567 = vmatprep.subr.bf16.mxu0 0
    %1568 = vmatpush1.bf16.msra.mxu0 0
    %1569 = vmatprep.subr.bf16.mxu0 0
    %1570 = vmatpush1.bf16.msra.mxu0 0
    %1571 = vmatprep.subr.bf16.mxu0 0
    %1572 = vmatpush1.bf16.msra.mxu0 0
    %1573 = vmatprep.subr.bf16.mxu0 0
    %1574 = vmatpush1.bf16.msra.mxu0 0
    %1575 = vmatprep.subr.bf16.mxu0 0
    %1576 = vmatpush1.bf16.msra.mxu0 0
    %1577 = vmatprep.subr.bf16.mxu0 0
    %1578 = vmatpush1.bf16.msra.mxu0 0
    %1579 = vmatprep.subr.bf16.mxu0 0
    %1580 = vmatpush1.bf16.msra.mxu0 0
    %1581 = vmatprep.subr.bf16.mxu0 0
    %1582 = vmatpush1.bf16.msra.mxu0 0
    %1583 = vmatprep.subr.bf16.mxu0 0
    %1584 = vmatpush1.bf16.msra.mxu0 0
    %1585 = vmatprep.subr.bf16.mxu0 0
    %1586 = vmatpush1.bf16.msra.mxu0 0
    %1587 = vmatprep.subr.bf16.mxu0 0
    %1588 = vmatpush1.bf16.msra.mxu0 0
    %1589 = vmatprep.subr.bf16.mxu0 0
    %1590 = vmatpush1.bf16.msra.mxu0 0
    %1591 = vmatprep.subr.bf16.mxu0 0
    %1592 = vmatpush1.bf16.msra.mxu0 0
    %1593 = vmatprep.subr.bf16.mxu0 0
    %1594 = vmatpush1.bf16.msra.mxu0 0
    %1595 = vmatprep.subr.bf16.mxu0 0
    %1596 = vmatpush1.bf16.msra.mxu0 0
    %1597 = vmatprep.mubr.bf16.mxu0 0
    %1598 = vmatmul.mubr.bf16.gmra.mrb[0].mxu0 %v1560
    %v1599 = vpop.f32.mrb[0].mxu0
    %v1600 = vadd.f32 0.0, %v1599
    %v1601 = vpop.f32.mrb[0].mxu0
    %v1602 = vpop.f32.mrb[0].mxu0
    %v1603 = vpop.f32.mrb[0].mxu0
    %1604 = vdwg.mxu0
    %1605 = vrot.lane.b32.xlu0 %v1302, 64
    %v1606 = vpop.permute.xlu0 %1605
    %v1608 = vsel %vm641, %v1554, 0
    %v1611 = vsel %vm214, %v1606, 0
    %1613 = vmatprep.subr.bf16.mxu0 0
    %1614 = vmatpush1.bf16.msra.mxu0 %v1611
    %1615 = vmatprep.subr.bf16.mxu0 0
    %1616 = vmatpush1.bf16.msra.mxu0 0
    %1617 = vmatprep.subr.bf16.mxu0 0
    %1618 = vmatpush1.bf16.msra.mxu0 0
    %1619 = vmatprep.subr.bf16.mxu0 0
    %1620 = vmatpush1.bf16.msra.mxu0 0
    %1621 = vmatprep.subr.bf16.mxu0 0
    %1622 = vmatpush1.bf16.msra.mxu0 0
    %1623 = vmatprep.subr.bf16.mxu0 0
    %1624 = vmatpush1.bf16.msra.mxu0 0
    %1625 = vmatprep.subr.bf16.mxu0 0
    %1626 = vmatpush1.bf16.msra.mxu0 0
    %1627 = vmatprep.subr.bf16.mxu0 0
    %1628 = vmatpush1.bf16.msra.mxu0 0
    %1629 = vmatprep.subr.bf16.mxu0 0
    %1630 = vmatpush1.bf16.msra.mxu0 0
    %1631 = vmatprep.subr.bf16.mxu0 0
    %1632 = vmatpush1.bf16.msra.mxu0 0
    %1633 = vmatprep.subr.bf16.mxu0 0
    %1634 = vmatpush1.bf16.msra.mxu0 0
    %1635 = vmatprep.subr.bf16.mxu0 0
    %1636 = vmatpush1.bf16.msra.mxu0 0
    %1637 = vmatprep.subr.bf16.mxu0 0
    %1638 = vmatpush1.bf16.msra.mxu0 0
    %1639 = vmatprep.subr.bf16.mxu0 0
    %1640 = vmatpush1.bf16.msra.mxu0 0
    %1641 = vmatprep.subr.bf16.mxu0 0
    %1642 = vmatpush1.bf16.msra.mxu0 0
    %1643 = vmatprep.subr.bf16.mxu0 0
    %1644 = vmatpush1.bf16.msra.mxu0 0
    %1645 = vmatprep.mubr.bf16.mxu0 0
    %1646 = vmatmul.mubr.bf16.gmra.mrb[0].mxu0 %v1608
    %v1647 = vpop.f32.mrb[0].mxu0
    %v1648 = vadd.f32 0.0, %v1647
    %v1649 = vpop.f32.mrb[0].mxu0
    %v1650 = vpop.f32.mrb[0].mxu0
    %v1651 = vpop.f32.mrb[0].mxu0
    %1652 = vdwg.mxu0
    %1653 = vrot.lane.b32.xlu0 %v1303, 64
    %v1654 = vpop.permute.xlu0 %1653
    %v1656 = vsel %vm641, %v1555, 0
    %v1659 = vsel %vm214, %v1654, 0
    %1661 = vmatprep.subr.bf16.mxu0 0
    %1662 = vmatpush1.bf16.msra.mxu0 %v1659
    %1663 = vmatprep.subr.bf16.mxu0 0
    %1664 = vmatpush1.bf16.msra.mxu0 0
    %1665 = vmatprep.subr.bf16.mxu0 0
    %1666 = vmatpush1.bf16.msra.mxu0 0
    %1667 = vmatprep.subr.bf16.mxu0 0
    %1668 = vmatpush1.bf16.msra.mxu0 0
    %1669 = vmatprep.subr.bf16.mxu0 0
    %1670 = vmatpush1.bf16.msra.mxu0 0
    %1671 = vmatprep.subr.bf16.mxu0 0
    %1672 = vmatpush1.bf16.msra.mxu0 0
    %1673 = vmatprep.subr.bf16.mxu0 0
    %1674 = vmatpush1.bf16.msra.mxu0 0
    %1675 = vmatprep.subr.bf16.mxu0 0
    %1676 = vmatpush1.bf16.msra.mxu0 0
    %1677 = vmatprep.subr.bf16.mxu0 0
    %1678 = vmatpush1.bf16.msra.mxu0 0
    %1679 = vmatprep.subr.bf16.mxu0 0
    %1680 = vmatpush1.bf16.msra.mxu0 0
    %1681 = vmatprep.subr.bf16.mxu0 0
    %1682 = vmatpush1.bf16.msra.mxu0 0
    %1683 = vmatprep.subr.bf16.mxu0 0
    %1684 = vmatpush1.bf16.msra.mxu0 0
    %1685 = vmatprep.subr.bf16.mxu0 0
    %1686 = vmatpush1.bf16.msra.mxu0 0
    %1687 = vmatprep.subr.bf16.mxu0 0
    %1688 = vmatpush1.bf16.msra.mxu0 0
    %1689 = vmatprep.subr.bf16.mxu0 0
    %1690 = vmatpush1.bf16.msra.mxu0 0
    %1691 = vmatprep.subr.bf16.mxu0 0
    %1692 = vmatpush1.bf16.msra.mxu0 0
    %1693 = vmatprep.mubr.bf16.mxu0 0
    %1694 = vmatmul.mubr.bf16.gmra.mrb[0].mxu0 %v1656
    %v1695 = vpop.f32.mrb[0].mxu0
    %v1696 = vadd.f32 0.0, %v1695
    %v1697 = vpop.f32.mrb[0].mxu0
    %v1698 = vpop.f32.mrb[0].mxu0
    %v1699 = vpop.f32.mrb[0].mxu0
    %1700 = vdwg.mxu0
    %1701 = vrot.lane.b32.xlu0 %v1304, 64
    %v1702 = vpop.permute.xlu0 %1701
    %v1704 = vsel %vm641, %v1556, 0
    %v1707 = vsel %vm214, %v1702, 0
    %1709 = vmatprep.subr.bf16.mxu0 0
    %1710 = vmatpush1.bf16.msra.mxu0 %v1707
    %1711 = vmatprep.subr.bf16.mxu0 0
    %1712 = vmatpush1.bf16.msra.mxu0 0
    %1713 = vmatprep.subr.bf16.mxu0 0
    %1714 = vmatpush1.bf16.msra.mxu0 0
    %1715 = vmatprep.subr.bf16.mxu0 0
    %1716 = vmatpush1.bf16.msra.mxu0 0
    %1717 = vmatprep.subr.bf16.mxu0 0
    %1718 = vmatpush1.bf16.msra.mxu0 0
    %1719 = vmatprep.subr.bf16.mxu0 0
    %1720 = vmatpush1.bf16.msra.mxu0 0
    %1721 = vmatprep.subr.bf16.mxu0 0
    %1722 = vmatpush1.bf16.msra.mxu0 0
    %1723 = vmatprep.subr.bf16.mxu0 0
    %1724 = vmatpush1.bf16.msra.mxu0 0
    %1725 = vmatprep.subr.bf16.mxu0 0
    %1726 = vmatpush1.bf16.msra.mxu0 0
    %1727 = vmatprep.subr.bf16.mxu0 0
    %1728 = vmatpush1.bf16.msra.mxu0 0
    %1729 = vmatprep.subr.bf16.mxu0 0
    %1730 = vmatpush1.bf16.msra.mxu0 0
    %1731 = vmatprep.subr.bf16.mxu0 0
    %1732 = vmatpush1.bf16.msra.mxu0 0
    %1733 = vmatprep.subr.bf16.mxu0 0
    %1734 = vmatpush1.bf16.msra.mxu0 0
    %1735 = vmatprep.subr.bf16.mxu0 0
    %1736 = vmatpush1.bf16.msra.mxu0 0
    %1737 = vmatprep.subr.bf16.mxu0 0
    %1738 = vmatpush1.bf16.msra.mxu0 0
    %1739 = vmatprep.subr.bf16.mxu0 0
    %1740 = vmatpush1.bf16.msra.mxu0 0
    %1741 = vmatprep.mubr.bf16.mxu0 0
    %1742 = vmatmul.mubr.bf16.gmra.mrb[0].mxu0 %v1704
    %v1743 = vpop.f32.mrb[0].mxu0
    %v1744 = vadd.f32 0.0, %v1743
    %v1745 = vpop.f32.mrb[0].mxu0
    %v1746 = vpop.f32.mrb[0].mxu0
    %v1747 = vpop.f32.mrb[0].mxu0
    %1748 = vdwg.mxu0
    %1750 = vrot.lane.b32.xlu0 %v1648, 16
    %v1751 = vpop.permute.xlu0 %1750
    %v1753 = vsel %vm431, %v1600, %v1751
    %1755 = vrot.lane.b32.xlu0 %v1744, 16
    %v1756 = vpop.permute.xlu0 %1755
    %v1758 = vsel %vm431, %v1696, %v1756
    %s1759 = scalar_lea.vmem %s10, 16
    %v1760 = vld [vmem:[%s1759] sm:$0xf]
    %v1761 = vld [vmem:[%s1759 + $0x4] sm:$0xf]
    %v1762 = vld [vmem:[%s1759 + $0x8] sm:$0xf]
    %v1763 = vld [vmem:[%s1759 + $0xc] sm:$0xf]
    %v1764 = vpack.c.bf16 %v1758, %v1753
    %s1765 = scalar_lea.vmem %s11, 1
    %v1766 = vld [vmem:[%s1765] sm:$0x1]
    %v1768 = vlaneseq
    %v1769 = vshrl.u32 %v1768, 7
    %v1770 = vsub.s32 0, %v1769
    %v1771 = vrot.slane %v1766, %v1770
    %v1777 = vunpack.c.l.b16 %v1760
    %v1778 = vunpack.c.l.b16 %v1761
    %v1779 = vunpack.c.l.b16 %v1762
    %v1780 = vunpack.c.l.b16 %v1763
    %v1781 = vpack.c.b16 %v1778, %v1777
    %v1782 = vpack.c.b16 %v1780, %v1779
    %v1786 = vsel %vm297, %v1764, 0
    %1788 = vmatprep.subr.bf16.mxu0 0
    %1789 = vmatpush1.bf16.msra.mxu0 %v1781
    %1790 = vmatprep.subr.bf16.mxu0 0
    %1791 = vmatpush1.bf16.msra.mxu0 %v1782
    %1792 = vmatprep.subr.bf16.mxu0 0
    %1793 = vmatpush1.bf16.msra.mxu0 0
    %1794 = vmatprep.subr.bf16.mxu0 0
    %1795 = vmatpush1.bf16.msra.mxu0 0
    %1796 = vmatprep.subr.bf16.mxu0 0
    %1797 = vmatpush1.bf16.msra.mxu0 0
    %1798 = vmatprep.subr.bf16.mxu0 0
    %1799 = vmatpush1.bf16.msra.mxu0 0
    %1800 = vmatprep.subr.bf16.mxu0 0
    %1801 = vmatpush1.bf16.msra.mxu0 0
    %1802 = vmatprep.subr.bf16.mxu0 0
    %1803 = vmatpush1.bf16.msra.mxu0 0
    %1804 = vmatprep.subr.bf16.mxu0 0
    %1805 = vmatpush1.bf16.msra.mxu0 0
    %1806 = vmatprep.subr.bf16.mxu0 0
    %1807 = vmatpush1.bf16.msra.mxu0 0
    %1808 = vmatprep.subr.bf16.mxu0 0
    %1809 = vmatpush1.bf16.msra.mxu0 0
    %1810 = vmatprep.subr.bf16.mxu0 0
    %1811 = vmatpush1.bf16.msra.mxu0 0
    %1812 = vmatprep.subr.bf16.mxu0 0
    %1813 = vmatpush1.bf16.msra.mxu0 0
    %1814 = vmatprep.subr.bf16.mxu0 0
    %1815 = vmatpush1.bf16.msra.mxu0 0
    %1816 = vmatprep.subr.bf16.mxu0 0
    %1817 = vmatpush1.bf16.msra.mxu0 0
    %1818 = vmatprep.subr.bf16.mxu0 0
    %1819 = vmatpush1.bf16.msra.mxu0 0
    %1820 = vmatprep.mubr.bf16.mxu0 0
    %1821 = vmatmul.mubr.bf16.gmra.mrb[0].mxu0 %v1786
    %v1822 = vpop.f32.mrb[0].mxu0
    %v1823 = vadd.f32 %v1771, %v1822
    %v1824 = vpop.f32.mrb[0].mxu0
    %v1825 = vpop.f32.mrb[0].mxu0
    %v1826 = vadd.f32 %v1771, %v1825
    %v1827 = vpop.f32.mrb[0].mxu0
    %1828 = vdwg.mxu0
    %v1829 = vadd.f32 %v1823, %v1221
    %v1830 = vadd.f32 %v1826, %v1222
    %s1831 = scalar_lea.vmem %s12, 1
    %v1832 = vld [vmem:[%s1831] sm:$0x1]
    %s1833 = scalar_lea.vmem %s13, 1
    %v1834 = vld [vmem:[%s1833] sm:$0x1]
    %v1835 = vsel %vm297, %v1829, 0.0
    %1836 = vadd.xlane.f32.xlu0 %v1835
    %v1837 = vpop.xlane.xlu0 %1836
    %v1838 = vsel %vm297, %v1830, 0.0
    %1839 = vadd.xlane.f32.xlu0 %v1838
    %v1840 = vpop.xlane.xlu0 %1839
    %v1841 = vmul.f32 %v1837, %v304
    %v1842 = vmul.f32 %v1840, %v304
    %v1843 = vsub.f32 %v1829, %v1841
    %v1844 = vsub.f32 %v1830, %v1842
    %v1845 = vmul.f32 %v1843, %v1843
    %v1846 = vmul.f32 %v1844, %v1844
    %v1847 = vsel %vm297, %v1845, 0.0
    %1848 = vadd.xlane.f32.xlu0 %v1847
    %v1849 = vpop.xlane.xlu0 %1848
    %v1850 = vsel %vm297, %v1846, 0.0
    %1851 = vadd.xlane.f32.xlu0 %v1850
    %v1852 = vpop.xlane.xlu0 %1851
    %v1853 = vmul.f32 %v1849, %v304
    %v1854 = vmul.f32 %v1852, %v304
    %v1855 = vadd.f32 %v1853, 1e-12
    %v1856 = vadd.f32 %v1854, 1e-12
    %v1857 = vrsqrt.pop %v1855
    %v1858 = vrsqrt.pop %v1856
    %v1859 = vmul.f32 %v1843, %v1857
    %v1860 = vmul.f32 %v1844, %v1858
    %v1862 = vlaneseq
    %v1863 = vshrl.u32 %v1862, 7
    %v1864 = vsub.s32 0, %v1863
    %v1865 = vrot.slane %v1832, %v1864
    %v1867 = vmul.f32 %v1859, %v1865
    %v1868 = vmul.f32 %v1860, %v1865
    %v1870 = vlaneseq
    %v1871 = vshrl.u32 %v1870, 7
    %v1872 = vsub.s32 0, %v1871
    %v1873 = vrot.slane %v1834, %v1872
    %v1875 = vadd.f32 %v1867, %v1873
    %v1876 = vadd.f32 %v1868, %v1873
    %s1877 = scalar_lea.vmem %s14, 16
    %v1878 = vld [vmem:[%s1877] sm:$0xf]
    %v1879 = vld [vmem:[%s1877 + $0x4] sm:$0xf]
    %v1880 = vld [vmem:[%s1877 + $0x8] sm:$0xf]
    %v1881 = vld [vmem:[%s1877 + $0xc] sm:$0xf]
    %v1882 = vpack.c.bf16 %v1876, %v1875
    %s1883 = scalar_lea.vmem %s15, 1
    %v1884 = vld [vmem:[%s1883] sm:$0x1]
    %v1886 = vlaneseq
    %v1887 = vshrl.u32 %v1886, 7
    %v1888 = vsub.s32 0, %v1887
    %v1889 = vrot.slane %v1884, %v1888
    %v1895 = vunpack.c.l.b16 %v1878
    %v1896 = vunpack.c.l.b16 %v1879
    %v1897 = vunpack.c.l.b16 %v1880
    %v1898 = vunpack.c.l.b16 %v1881
    %v1899 = vpack.c.b16 %v1896, %v1895
    %v1900 = vpack.c.b16 %v1898, %v1897
    %v1904 = vsel %vm297, %v1882, 0
    %1906 = vmatprep.subr.bf16.mxu0 0
    %1907 = vmatpush1.bf16.msra.mxu0 %v1899
    %1908 = vmatprep.subr.bf16.mxu0 0
    %1909 = vmatpush1.bf16.msra.mxu0 %v1900
    %1910 = vmatprep.subr.bf16.mxu0 0
    %1911 = vmatpush1.bf16.msra.mxu0 0
    %1912 = vmatprep.subr.bf16.mxu0 0
    %1913 = vmatpush1.bf16.msra.mxu0 0
    %1914 = vmatprep.subr.bf16.mxu0 0
    %1915 = vmatpush1.bf16.msra.mxu0 0
    %1916 = vmatprep.subr.bf16.mxu0 0
    %1917 = vmatpush1.bf16.msra.mxu0 0
    %1918 = vmatprep.subr.bf16.mxu0 0
    %1919 = vmatpush1.bf16.msra.mxu0 0
    %1920 = vmatprep.subr.bf16.mxu0 0
    %1921 = vmatpush1.bf16.msra.mxu0 0
    %1922 = vmatprep.subr.bf16.mxu0 0
    %1923 = vmatpush1.bf16.msra.mxu0 0
    %1924 = vmatprep.subr.bf16.mxu0 0
    %1925 = vmatpush1.bf16.msra.mxu0 0
    %1926 = vmatprep.subr.bf16.mxu0 0
    %1927 = vmatpush1.bf16.msra.mxu0 0
    %1928 = vmatprep.subr.bf16.mxu0 0
    %1929 = vmatpush1.bf16.msra.mxu0 0
    %1930 = vmatprep.subr.bf16.mxu0 0
    %1931 = vmatpush1.bf16.msra.mxu0 0
    %1932 = vmatprep.subr.bf16.mxu0 0
    %1933 = vmatpush1.bf16.msra.mxu0 0
    %1934 = vmatprep.subr.bf16.mxu0 0
    %1935 = vmatpush1.bf16.msra.mxu0 0
    %1936 = vmatprep.subr.bf16.mxu0 0
    %1937 = vmatpush1.bf16.msra.mxu0 0
    %1938 = vmatprep.mubr.bf16.mxu0 0
    %1939 = vmatmul.mubr.bf16.gmra.mrb[0].mxu0 %v1904
    %v1940 = vpop.f32.mrb[0].mxu0
    %v1941 = vadd.f32 %v1889, %v1940
    %v1942 = vpop.f32.mrb[0].mxu0
    %v1943 = vpop.f32.mrb[0].mxu0
    %v1944 = vadd.f32 %v1889, %v1943
    %v1945 = vpop.f32.mrb[0].mxu0
    %1946 = vdwg.mxu0
    %v1947 = vmul.f32 %v1941, 0.5
    %v1948 = vmul.f32 %v1944, 0.5
    %v1949 = vmul.f32 %v1941, 0.044715
    %v1950 = vmul.f32 %v1944, 0.044715
    %v1951 = vmul.f32 %v1949, %v1941
    %v1952 = vmul.f32 %v1950, %v1944
    %v1953 = vmul.f32 %v1951, %v1941
    %v1954 = vmul.f32 %v1952, %v1944
    %v1955 = vadd.f32 %v1941, %v1953
    %v1956 = vadd.f32 %v1944, %v1954
    %v1957 = vmul.f32 %v1955, 0.7978846
    %v1958 = vmul.f32 %v1956, 0.7978846
    %v1959 = vtanh.pop %v1957
    %v1960 = vtanh.pop %v1958
    %v1961 = vadd.f32 %v1959, 1.0
    %v1962 = vadd.f32 %v1960, 1.0
    %v1963 = vmul.f32 %v1947, %v1961
    %v1964 = vmul.f32 %v1948, %v1962
    %s1965 = scalar_lea.vmem %s16, 32
    %v1966 = vld [vmem:[%s1965] sm:$0xf]
    %v1967 = vld [vmem:[%s1965 + $0x4] sm:$0xf]
    %v1968 = vld [vmem:[%s1965 + $0x8] sm:$0xf]
    %v1969 = vld [vmem:[%s1965 + $0xc] sm:$0xf]
    %v1970 = vld [vmem:[%s1965 + $0x10] sm:$0xf]
    %v1971 = vld [vmem:[%s1965 + $0x14] sm:$0xf]
    %v1972 = vld [vmem:[%s1965 + $0x18] sm:$0xf]
    %v1973 = vld [vmem:[%s1965 + $0x1c] sm:$0xf]
    %v1974 = vpack.c.bf16 %v1964, %v1963
    %s1975 = scalar_lea.vmem %s17, 1
    %v1976 = vld [vmem:[%s1975] sm:$0x1]
    %v1978 = vlaneseq
    %v1979 = vshrl.u32 %v1978, 7
    %v1980 = vsub.s32 0, %v1979
    %v1981 = vrot.slane %v1976, %v1980
    %v1991 = vunpack.c.l.b16 %v1966
    %v1992 = vunpack.c.l.b16 %v1967
    %v1993 = vunpack.c.l.b16 %v1968
    %v1994 = vunpack.c.l.b16 %v1969
    %v1995 = vunpack.c.l.b16 %v1970
    %v1996 = vunpack.c.l.b16 %v1971
    %v1997 = vunpack.c.l.b16 %v1972
    %v1998 = vunpack.c.l.b16 %v1973
    %v1999 = vpack.c.b16 %v1992, %v1991
    %v2000 = vpack.c.b16 %v1994, %v1993
    %v2001 = vpack.c.b16 %v1996, %v1995
    %v2002 = vpack.c.b16 %v1998, %v1997
    %v2008 = vsel %vm1132, %v1974, 0
    %2010 = vmatprep.subr.bf16.mxu0 0
    %2011 = vmatpush1.bf16.msra.mxu0 %v1999
    %2012 = vmatprep.subr.bf16.mxu0 0
    %2013 = vmatpush1.bf16.msra.mxu0 %v2000
    %2014 = vmatprep.subr.bf16.mxu0 0
    %2015 = vmatpush1.bf16.msra.mxu0 %v2001
    %2016 = vmatprep.subr.bf16.mxu0 0
    %2017 = vmatpush1.bf16.msra.mxu0 %v2002
    %2018 = vmatprep.subr.bf16.mxu0 0
    %2019 = vmatpush1.bf16.msra.mxu0 0
    %2020 = vmatprep.subr.bf16.mxu0 0
    %2021 = vmatpush1.bf16.msra.mxu0 0
    %2022 = vmatprep.subr.bf16.mxu0 0
    %2023 = vmatpush1.bf16.msra.mxu0 0
    %2024 = vmatprep.subr.bf16.mxu0 0
    %2025 = vmatpush1.bf16.msra.mxu0 0
    %2026 = vmatprep.subr.bf16.mxu0 0
    %2027 = vmatpush1.bf16.msra.mxu0 0
    %2028 = vmatprep.subr.bf16.mxu0 0
    %2029 = vmatpush1.bf16.msra.mxu0 0
    %2030 = vmatprep.subr.bf16.mxu0 0
    %2031 = vmatpush1.bf16.msra.mxu0 0
    %2032 = vmatprep.subr.bf16.mxu0 0
    %2033 = vmatpush1.bf16.msra.mxu0 0
    %2034 = vmatprep.subr.bf16.mxu0 0
    %2035 = vmatpush1.bf16.msra.mxu0 0
    %2036 = vmatprep.subr.bf16.mxu0 0
    %2037 = vmatpush1.bf16.msra.mxu0 0
    %2038 = vmatprep.subr.bf16.mxu0 0
    %2039 = vmatpush1.bf16.msra.mxu0 0
    %2040 = vmatprep.subr.bf16.mxu0 0
    %2041 = vmatpush1.bf16.msra.mxu0 0
    %2042 = vmatprep.mubr.bf16.mxu0 0
    %2043 = vmatmul.mubr.bf16.gmra.mrb[0].mxu0 %v2008
    %v2044 = vpop.f32.mrb[0].mxu0
    %v2045 = vadd.f32 %v1981, %v2044
    %v2046 = vpop.f32.mrb[0].mxu0
    %v2047 = vpop.f32.mrb[0].mxu0
    %v2048 = vadd.f32 %v1981, %v2047
    %v2049 = vpop.f32.mrb[0].mxu0
    %2050 = vdwg.mxu0
    %v2051 = vadd.f32 %v2045, %v1875
    %v2052 = vadd.f32 %v2048, %v1876
    %s2053 = scalar_lea.vmem %s18, 1
    %v2054 = vld [vmem:[%s2053] sm:$0x1]
    %s2055 = scalar_lea.vmem %s19, 1
    %v2056 = vld [vmem:[%s2055] sm:$0x1]
    %v2057 = vsel %vm297, %v2051, 0.0
    %2058 = vadd.xlane.f32.xlu0 %v2057
    %v2059 = vpop.xlane.xlu0 %2058
    %v2060 = vsel %vm297, %v2052, 0.0
    %2061 = vadd.xlane.f32.xlu0 %v2060
    %v2062 = vpop.xlane.xlu0 %2061
    %v2063 = vmul.f32 %v2059, %v304
    %v2064 = vmul.f32 %v2062, %v304
    %v2065 = vsub.f32 %v2051, %v2063
    %v2066 = vsub.f32 %v2052, %v2064
    %v2067 = vmul.f32 %v2065, %v2065
    %v2068 = vmul.f32 %v2066, %v2066
    %v2069 = vsel %vm297, %v2067, 0.0
    %2070 = vadd.xlane.f32.xlu0 %v2069
    %v2071 = vpop.xlane.xlu0 %2070
    %v2072 = vsel %vm297, %v2068, 0.0
    %2073 = vadd.xlane.f32.xlu0 %v2072
    %v2074 = vpop.xlane.xlu0 %2073
    %v2075 = vmul.f32 %v2071, %v304
    %v2076 = vmul.f32 %v2074, %v304
    %v2077 = vadd.f32 %v2075, 1e-12
    %v2078 = vadd.f32 %v2076, 1e-12
    %v2079 = vrsqrt.pop %v2077
    %v2080 = vrsqrt.pop %v2078
    %v2081 = vmul.f32 %v2065, %v2079
    %v2082 = vmul.f32 %v2066, %v2080
    %v2084 = vlaneseq
    %v2085 = vshrl.u32 %v2084, 7
    %v2086 = vsub.s32 0, %v2085
    %v2087 = vrot.slane %v2054, %v2086
    %v2089 = vmul.f32 %v2081, %v2087
    %v2090 = vmul.f32 %v2082, %v2087
    %v2092 = vlaneseq
    %v2093 = vshrl.u32 %v2092, 7
    %v2094 = vsub.s32 0, %v2093
    %v2095 = vrot.slane %v2056, %v2094
    %v2097 = vadd.f32 %v2089, %v2095
    %v2098 = vadd.f32 %v2090, %v2095
    %2099 = vst.msk [vmem:[#allocation2] sm:$0xff] %vm297, %v2097
    %2100 = vst.msk [vmem:[#allocation2 + $0x8] sm:$0xff] %vm297, %v2098
    %v2101 = vld [vmem:[#allocation2] ss:$8 sm:$0x3]
    %v2102 = vld [vmem:[%s20] sm:$0xf]
    %v2103 = vld [vmem:[%s20 + $0x4] sm:$0xf]
    %v2104 = vld [vmem:[%s20 + $0x8] sm:$0xf]
    %v2105 = vld [vmem:[%s20 + $0xc] sm:$0xf]
    %v2106 = vpack.c.bf16 %v2101, %v2101
    %v2107 = vld [vmem:[%s21] sm:$0x1]
    %v2109 = vlaneseq
    %v2110 = vshrl.u32 %v2109, 7
    %v2111 = vsub.s32 0, %v2110
    %v2112 = vrot.slane %v2107, %v2111
    %v2118 = vunpack.c.l.b16 %v2102
    %v2119 = vunpack.c.l.b16 %v2103
    %v2120 = vunpack.c.l.b16 %v2104
    %v2121 = vunpack.c.l.b16 %v2105
    %v2122 = vpack.c.b16 %v2119, %v2118
    %v2123 = vpack.c.b16 %v2121, %v2120
    %v2127 = vsel %vm297, %v2106, 0
    %2129 = vmatprep.subr.bf16.mxu0 0
    %2130 = vmatpush1.bf16.msra.mxu0 %v2122
    %2131 = vmatprep.subr.bf16.mxu0 0
    %2132 = vmatpush1.bf16.msra.mxu0 %v2123
    %2133 = vmatprep.subr.bf16.mxu0 0
    %2134 = vmatpush1.bf16.msra.mxu0 0
    %2135 = vmatprep.subr.bf16.mxu0 0
    %2136 = vmatpush1.bf16.msra.mxu0 0
    %2137 = vmatprep.subr.bf16.mxu0 0
    %2138 = vmatpush1.bf16.msra.mxu0 0
    %2139 = vmatprep.subr.bf16.mxu0 0
    %2140 = vmatpush1.bf16.msra.mxu0 0
    %2141 = vmatprep.subr.bf16.mxu0 0
    %2142 = vmatpush1.bf16.msra.mxu0 0
    %2143 = vmatprep.subr.bf16.mxu0 0
    %2144 = vmatpush1.bf16.msra.mxu0 0
    %2145 = vmatprep.subr.bf16.mxu0 0
    %2146 = vmatpush1.bf16.msra.mxu0 0
    %2147 = vmatprep.subr.bf16.mxu0 0
    %2148 = vmatpush1.bf16.msra.mxu0 0
    %2149 = vmatprep.subr.bf16.mxu0 0
    %2150 = vmatpush1.bf16.msra.mxu0 0
    %2151 = vmatprep.subr.bf16.mxu0 0
    %2152 = vmatpush1.bf16.msra.mxu0 0
    %2153 = vmatprep.subr.bf16.mxu0 0
    %2154 = vmatpush1.bf16.msra.mxu0 0
    %2155 = vmatprep.subr.bf16.mxu0 0
    %2156 = vmatpush1.bf16.msra.mxu0 0
    %2157 = vmatprep.subr.bf16.mxu0 0
    %2158 = vmatpush1.bf16.msra.mxu0 0
    %2159 = vmatprep.subr.bf16.mxu0 0
    %2160 = vmatpush1.bf16.msra.mxu0 0
    %2161 = vmatprep.mubr.bf16.mxu0 0
    %2162 = vmatmul.mubr.bf16.gmra.mrb[0].mxu0 %v2127
    %v2163 = vpop.f32.mrb[0].mxu0
    %v2164 = vadd.f32 %v2112, %v2163
    %v2165 = vpop.f32.mrb[0].mxu0
    %v2166 = vpop.f32.mrb[0].mxu0
    %v2167 = vpop.f32.mrb[0].mxu0
    %2168 = vdwg.mxu0
    %v2169 = vtanh.pop %v2164
    %vm2170 = vcmask 254976
    %2171 = vst.msk [vmem:[#allocation4] sm:$0x3] %vm2170, %v2169
    // Predicated region
    $region90: #{bert_forward.1} parent=1 // pred_check
      _
    $region91: #{bert_forward.1} parent=1 // pred_check_branch
      %2173 = sbr.rel (0) target = $region93
    $region92: #{bert_forward.1} parent=1 // pred_region
      %s2175 = ssub.s32 256, 256
      %2176 = vsyncadd [#allocation3], %s2175
      %s2177 = sshll.u32 [#allocation2], 4
      %s2178 = int_to_ptr.vmem [resolvable:$true] %s2177
      %2183 = dma.vmem_to_hbm [thread:$0]  %s2178, 256, %s22, [#allocation3], 128, 128, 8
    $region93: #{bert_forward.1} parent=1 // pred_fallthru
      _
    // Predicated region
    $region94: #{bert_forward.1} parent=1 // pred_check
      _
    $region95: #{bert_forward.1} parent=1 // pred_check_branch
      %2185 = sbr.rel (0) target = $region97
    $region96: #{bert_forward.1} parent=1 // pred_region
      %s2187 = ssub.s32 32, 32
      %2188 = vsyncadd [#allocation5], %s2187
      %s2190 = sshll.u32 [#allocation4], 4
      %s2191 = int_to_ptr.vmem [resolvable:$true] %s2190
      %2193 = dma.vmem_to_hbm [thread:$0]  %s2191, 32, %s23, [#allocation5]
    $region97: #{bert_forward.1} parent=1 // pred_fallthru
      _
    // Predicated region
    $region98: #{bert_forward.1} parent=1 // pred_check
      _
    $region99: #{bert_forward.1} parent=1 // pred_check_branch
      %2195 = sbr.rel (0) target = $region101
    $region100: #{bert_forward.1} parent=1 // pred_region
      %2196 = dma.done [#allocation3], 256
    $region101: #{bert_forward.1} parent=1 // pred_fallthru
      _
    // Predicated region
    $region102: #{bert_forward.1} parent=1 // pred_check
      _
    $region103: #{bert_forward.1} parent=1 // pred_check_branch
      %2198 = sbr.rel (0) target = $region105
    $region104: #{bert_forward.1} parent=1 // pred_region
      %2199 = dma.done [#allocation5], 32
    $region105: #{bert_forward.1} parent=1 // pred_fallthru
      _
    %2200 = vsyncpa [#allocation3], 1
    %2201 = vsyncpa [#allocation5], 1

</llo_original>
